<compile_context>
chip_gen: v7x
topology: tpu7x:2x2x1
jax: 0.10.0
libtpu: 0.0.40
codegen_flags: <defaults>
</compile_context>

<pallas_src>
import functools

import jax
import jax.numpy as jnp
from jax.experimental import pallas as pl
from jax.experimental.pallas import tpu as pltpu


CFG = dict(vocab=128, n_pos=32, n_layer=2, n_head=2, d=32, d_ff=128)


# --------------------------------------------------------------------------
# In-kernel helpers
# --------------------------------------------------------------------------

def _layernorm(x, g, b, eps=1e-5):
    mu = jnp.mean(x, axis=-1, keepdims=True)
    var = jnp.mean((x - mu) ** 2, axis=-1, keepdims=True)
    return (x - mu) * jax.lax.rsqrt(var + eps) * g + b


def _gelu_new(y):
    # GPT-2 "gelu_new" (tanh approximation)
    return 0.5 * y * (1.0 + jnp.tanh(
        0.7978845608028654 * (y + 0.044715 * y * y * y)))


# --------------------------------------------------------------------------
# Fused transformer-block kernel: one pallas_call per layer, grid over batch
# blocks; bt sequences (bt*T rows) per grid step.
# --------------------------------------------------------------------------

def _block_kernel(h_ref, mask_ref, ln1g_ref, ln1b_ref,
                  wqkv_ref, bqkv_ref, wo_ref, bo_ref,
                  ln2g_ref, ln2b_ref, wfc_ref, bfc_ref, wpr_ref, bpr_ref,
                  o_ref, *, n_head, seq_len, n_seq):
    d = h_ref.shape[-1]
    dh = d // n_head
    scale = 1.0 / float(dh) ** 0.5

    h = h_ref[...]                                         # (bt*T, d) f32 residual

    # --- attention block (LN1 fused in, residual in epilogue) ---
    x = _layernorm(h, ln1g_ref[...], ln1b_ref[...])
    # one lane-dense fused QKV matmul, bf16 operands, f32 accumulation
    qkv = jnp.dot(x.astype(jnp.bfloat16), wqkv_ref[...],
                  preferred_element_type=jnp.float32) + bqkv_ref[...]   # (bt*T, 3d)

    # causal structure generated in-kernel (no (B,T,T) bias streamed from HBM)
    row_i = jax.lax.broadcasted_iota(jnp.int32, (seq_len, seq_len), 0)
    col_i = jax.lax.broadcasted_iota(jnp.int32, (seq_len, seq_len), 1)
    causal = row_i >= col_i

    seq_outs = []
    for b in range(n_seq):                                 # static loop over sequences
        r0 = b * seq_len
        qkv_b = qkv[r0:r0 + seq_len]                       # (T, 3d) f32
        keep = causal & (mask_ref[b] > 0.0)                # (T,T) & (1,T) -> (T,T)
        bias = jnp.where(keep, 0.0, -1e9).astype(jnp.float32)
        head_outs = []
        # NOTE: heads are static lane slices of the fused QKV result; with 12+
        # heads at real size this loop should become lax.fori_loop(unroll=2-4).
        for hh in range(n_head):
            q = qkv_b[:, hh * dh:(hh + 1) * dh].astype(jnp.bfloat16)
            k = qkv_b[:, d + hh * dh: d + (hh + 1) * dh].astype(jnp.bfloat16)
            v = qkv_b[:, 2 * d + hh * dh: 2 * d + (hh + 1) * dh].astype(jnp.bfloat16)
            s = jax.lax.dot_general(q, k, (((1,), (1,)), ((), ())),
                                    preferred_element_type=jnp.float32) * scale + bias
            m = jnp.max(s, axis=-1, keepdims=True)
            p = jnp.exp(s - m)
            p = p / jnp.sum(p, axis=-1, keepdims=True)     # exact softmax normalize
            head_outs.append(jnp.dot(p.astype(jnp.bfloat16), v,
                                     preferred_element_type=jnp.float32))
        seq_outs.append(jnp.concatenate(head_outs, axis=-1))   # (T, d)
    attn = jnp.concatenate(seq_outs, axis=0)               # (bt*T, d) f32
    # single lane-dense (d, d) out-projection
    attn_out = jnp.dot(attn.astype(jnp.bfloat16), wo_ref[...],
                       preferred_element_type=jnp.float32) + bo_ref[...]
    h = h + attn_out

    # --- MLP block (LN2 fused in, residual in epilogue) ---
    x2 = _layernorm(h, ln2g_ref[...], ln2b_ref[...])
    ff = _gelu_new(jnp.dot(x2.astype(jnp.bfloat16), wfc_ref[...],
                           preferred_element_type=jnp.float32) + bfc_ref[...])
    o_ref[...] = h + jnp.dot(ff.astype(jnp.bfloat16), wpr_ref[...],
                             preferred_element_type=jnp.float32) + bpr_ref[...]


def _pick_bt(B, T, target_rows=128):
    """Sequences per grid step: large enough row slabs to fill sublanes and
    amortize per-step overhead, while keeping blocks (8,128)-legal."""
    if T % 8 != 0:
        return B
    bt = max(1, min(B, -(-target_rows // T)))   # ceil(target_rows / T)
    while B % bt:
        bt -= 1
    return bt


def transformer_block(h2d, masks3d, lyr, *, n_head, seq_len, bt):
    M, d = h2d.shape
    B = masks3d.shape[0]
    rows = bt * seq_len
    d3 = lyr["w_qkv"].shape[1]
    dff = lyr["w_fc"].shape[1]

    def rep(shape):
        return pl.BlockSpec(shape, lambda i: (0,) * len(shape))

    kern = functools.partial(_block_kernel, n_head=n_head,
                             seq_len=seq_len, n_seq=bt)
    return pl.pallas_call(
        kern,
        out_shape=jax.ShapeDtypeStruct((M, d), jnp.float32),
        grid=(B // bt,),
        in_specs=[
            pl.BlockSpec((rows, d), lambda i: (i, 0)),       # residual slab
            pl.BlockSpec((bt, 1, seq_len), lambda i: (i, 0, 0)),  # per-seq mask rows
            rep((1, d)), rep((1, d)),                        # ln1 gamma/beta
            rep((d, d3)), rep((1, d3)),                      # fused w_qkv (bf16), b_qkv
            rep((d, d)), rep((1, d)),                        # w_o (bf16), b_o
            rep((1, d)), rep((1, d)),                        # ln2 gamma/beta
            rep((d, dff)), rep((1, dff)),                    # w_fc (bf16), b_fc
            rep((dff, d)), rep((1, d)),                      # w_pr (bf16), b_pr
        ],
        out_specs=pl.BlockSpec((rows, d), lambda i: (i, 0)),
        compiler_params=pltpu.CompilerParams(
            dimension_semantics=("parallel",),
            vmem_limit_bytes=48 * 1024 * 1024),
    )(h2d, masks3d,
      lyr["ln1_g"], lyr["ln1_b"],
      lyr["w_qkv"], lyr["b_qkv"],
      lyr["w_o"], lyr["b_o"],
      lyr["ln2_g"], lyr["ln2_b"],
      lyr["w_fc"], lyr["b_fc"],
      lyr["w_pr"], lyr["b_pr"])


# --------------------------------------------------------------------------
# Fused final-LN + tied LM head + cross-entropy kernel (vocab-tiled, online LSE)
# --------------------------------------------------------------------------

def _lmhead_xent_kernel(h_ref, lnfg_ref, lnfb_ref, wte_ref, labels_ref,
                        logits_ref, loss_ref,
                        x_sc, m_sc, l_sc, t_sc, *, tile_v):
    vi = pl.program_id(1)
    nv = pl.num_programs(1)

    @pl.when(vi == 0)
    def _():
        # final layernorm computed once per row tile, reused across vocab tiles
        x = _layernorm(h_ref[...], lnfg_ref[...], lnfb_ref[...])
        x_sc[...] = x.astype(x_sc.dtype)                     # bf16 MXU operand
        m_sc[...] = jnp.full(m_sc.shape, -jnp.inf, jnp.float32)
        l_sc[...] = jnp.zeros(l_sc.shape, jnp.float32)
        t_sc[...] = jnp.zeros(t_sc.shape, jnp.float32)

    # tied LM head: bf16 x bf16 -> f32, wte used UNtransposed on its feature dim
    logits = jax.lax.dot_general(x_sc[...], wte_ref[...], (((1,), (1,)), ((), ())),
                                 preferred_element_type=jnp.float32)
    logits_ref[...] = logits.astype(logits_ref.dtype)        # bf16 writeback

    labels = labels_ref[...]                                 # (tile_m, 1) int32
    col = jax.lax.broadcasted_iota(jnp.int32, logits.shape, 1) + vi * tile_v
    t_sc[...] += jnp.sum(jnp.where(col == labels, logits, 0.0),
                         axis=-1, keepdims=True)
    m_new = jnp.maximum(m_sc[...], jnp.max(logits, axis=-1, keepdims=True))
    l_sc[...] = l_sc[...] * jnp.exp(m_sc[...] - m_new) + jnp.sum(
        jnp.exp(logits - m_new), axis=-1, keepdims=True)
    m_sc[...] = m_new

    @pl.when(vi == nv - 1)
    def _():
        valid = (labels != -100).astype(jnp.float32)
        lse = m_sc[...] + jnp.log(l_sc[...])
        loss_ref[...] = (lse - t_sc[...]) * valid


def lm_head_xent(h, ln_f_g, ln_f_b, wte_bf16, labels, *, tile_m=None, tile_v=512,
                 logits_dtype=jnp.bfloat16):
    M, d = h.shape
    V = wte_bf16.shape[0]
    if tile_m is None:
        tile_m = min(256, M)
        if M // tile_m < 2 and M % 16 == 0:      # ensure >=2 programs on 'parallel' axis
            tile_m = M // 2
    tile_v = min(tile_v, V)
    assert M % tile_m == 0 and V % tile_v == 0
    labels2d = labels.reshape(M, 1).astype(jnp.int32)

    kern = functools.partial(_lmhead_xent_kernel, tile_v=tile_v)
    logits, loss_rows = pl.pallas_call(
        kern,
        out_shape=(jax.ShapeDtypeStruct((M, V), logits_dtype),
                   jax.ShapeDtypeStruct((M, 1), jnp.float32)),
        grid=(M // tile_m, V // tile_v),
        in_specs=[
            pl.BlockSpec((tile_m, d), lambda mi, vi: (mi, 0)),
            pl.BlockSpec((1, d), lambda mi, vi: (0, 0)),
            pl.BlockSpec((1, d), lambda mi, vi: (0, 0)),
            pl.BlockSpec((tile_v, d), lambda mi, vi: (vi, 0)),
            pl.BlockSpec((tile_m, 1), lambda mi, vi: (mi, 0)),
        ],
        out_specs=(
            pl.BlockSpec((tile_m, tile_v), lambda mi, vi: (mi, vi)),
            pl.BlockSpec((tile_m, 1), lambda mi, vi: (mi, 0)),
        ),
        scratch_shapes=[
            pltpu.VMEM((tile_m, d), jnp.bfloat16),   # layernormed rows (bf16)
            pltpu.VMEM((tile_m, 1), jnp.float32),    # running max
            pltpu.VMEM((tile_m, 1), jnp.float32),    # running sum-exp
            pltpu.VMEM((tile_m, 1), jnp.float32),    # target logit
        ],
        compiler_params=pltpu.CompilerParams(
            dimension_semantics=("parallel", "arbitrary"),
            vmem_limit_bytes=48 * 1024 * 1024),
    )(h, ln_f_g, ln_f_b, wte_bf16, labels2d)

    # valid-count computed in plain JAX (removes the extra (tile_m,1) output stream)
    count = jnp.maximum(jnp.sum((labels != -100).astype(jnp.float32)), 1.0)
    return logits, jnp.sum(loss_rows) / count


# --------------------------------------------------------------------------
# GPT-2 model (synthetic small config), forward = (logits, loss)
# --------------------------------------------------------------------------

def init_params(key, cfg):
    def nrm(k, shape):
        return jax.random.normal(k, shape, jnp.float32) * 0.02
    ks = list(jax.random.split(key, 2 + 4 * cfg["n_layer"]))
    ki = iter(ks)
    d, dff = cfg["d"], cfg["d_ff"]
    params = {
        "wte": nrm(next(ki), (cfg["vocab"], d)),
        "wpe": nrm(next(ki), (cfg["n_pos"], d)),
        "ln_f_g": jnp.ones((d,), jnp.float32),
        "ln_f_b": jnp.zeros((d,), jnp.float32),
        "layers": [],
    }
    for _ in range(cfg["n_layer"]):
        params["layers"].append({
            "ln1_g": jnp.ones((d,), jnp.float32), "ln1_b": jnp.zeros((d,), jnp.float32),
            "w_qkv": nrm(next(ki), (d, 3 * d)), "b_qkv": jnp.zeros((3 * d,), jnp.float32),
            "w_o": nrm(next(ki), (d, d)), "b_o": jnp.zeros((d,), jnp.float32),
            "ln2_g": jnp.ones((d,), jnp.float32), "ln2_b": jnp.zeros((d,), jnp.float32),
            "w_fc": nrm(next(ki), (d, dff)), "b_fc": jnp.zeros((dff,), jnp.float32),
            "w_pr": nrm(next(ki), (dff, d)), "b_pr": jnp.zeros((d,), jnp.float32),
        })
    return params


def prepare_params(params):
    """One-time parameter prep (hoisted out of the per-forward per-layer path):
    bf16-cast all MXU weight operands, reshape biases/LN vectors to (1, n)."""
    d = params["wte"].shape[1]
    prep = {
        "wte": params["wte"],                              # f32 for embedding gather
        "wte_h": params["wte"].astype(jnp.bfloat16),       # bf16 for tied LM head
        "wpe": params["wpe"],
        "ln_f_g": params["ln_f_g"].reshape(1, d),
        "ln_f_b": params["ln_f_b"].reshape(1, d),
        "layers": [],
    }
    for lyr in params["layers"]:
        dff = lyr["w_fc"].shape[1]
        prep["layers"].append({
            "ln1_g": lyr["ln1_g"].reshape(1, d), "ln1_b": lyr["ln1_b"].reshape(1, d),
            "w_qkv": lyr["w_qkv"].astype(jnp.bfloat16),
            "b_qkv": lyr["b_qkv"].reshape(1, 3 * d),
            "w_o": lyr["w_o"].astype(jnp.bfloat16), "b_o": lyr["b_o"].reshape(1, d),
            "ln2_g": lyr["ln2_g"].reshape(1, d), "ln2_b": lyr["ln2_b"].reshape(1, d),
            "w_fc": lyr["w_fc"].astype(jnp.bfloat16), "b_fc": lyr["b_fc"].reshape(1, dff),
            "w_pr": lyr["w_pr"].astype(jnp.bfloat16), "b_pr": lyr["b_pr"].reshape(1, d),
        })
    return prep


def gpt_forward(params, ids, masks, target):
    B, T = ids.shape
    d, H, V = CFG["d"], CFG["n_head"], CFG["vocab"]
    bt = _pick_bt(B, T)

    # Embedding gather (glue, plain JAX); residual stream kept as a flat (B*T, d) slab.
    h = params["wte"][ids] + params["wpe"][jnp.arange(T)][None, :, :]   # (B, T, d)
    h2d = h.reshape(B * T, d)
    masks3d = masks.astype(jnp.float32).reshape(B, 1, T)   # per-seq key mask rows

    for lyr in params["layers"]:
        h2d = transformer_block(h2d, masks3d, lyr, n_head=H, seq_len=T, bt=bt)

    # Shifted causal-LM labels: row (b, t) predicts target[b, t+1]; last position
    # gets -100 (ignored), matching HF's shift semantics (padded labels are NOT
    # excluded, exactly like HF GPT2LMHeadModel with labels=input_ids).
    shifted = jnp.concatenate(
        [target[:, 1:], jnp.full((B, 1), -100, dtype=target.dtype)], axis=1)

    logits2d, loss = lm_head_xent(
        h2d, params["ln_f_g"], params["ln_f_b"],
        params["wte_h"], shifted.reshape(B * T))
    logits = logits2d.reshape(B, T, V)
    return logits, loss


# --------------------------------------------------------------------------

if __name__ == "__main__":
    key = jax.random.PRNGKey(0)
    pkey, ikey = jax.random.split(key)

    params = prepare_params(init_params(pkey, CFG))

    B, T = 2, 8
    ids = jax.random.randint(ikey, (B, T), 0, CFG["vocab"], dtype=jnp.int32)
    masks = jnp.ones((B, T), jnp.float32).at[1, -2:].set(0.0)   # some padding
    target = ids                                                # labels == input_ids

    fwd = jax.jit(gpt_forward)
    logits, loss = fwd(params, ids, masks, target)
    jax.block_until_ready((logits, loss))

    assert logits.shape == (B, T, CFG["vocab"])
    assert loss.shape == ()
    assert bool(jnp.isfinite(loss))
    print("KERNEL_OK")
</pallas_src>

<mosaic_0001>
module attributes {stable_mosaic.version = 11 : i64} {
  func.func @_lmhead_xent_kernel(%arg0: i32, %arg1: i32, %arg2: memref<8x32xf32, #tpu.memory_space<vmem>>, %arg3: memref<1x32xf32, #tpu.memory_space<vmem>>, %arg4: memref<1x32xf32, #tpu.memory_space<vmem>>, %arg5: memref<128x32xbf16, #tpu.memory_space<vmem>>, %arg6: memref<8x1xi32, #tpu.memory_space<vmem>>, %arg7: memref<8x128xbf16, #tpu.memory_space<vmem>>, %arg8: memref<8x1xf32, #tpu.memory_space<vmem>>, %arg9: memref<8x32xbf16, #tpu.memory_space<vmem>>, %arg10: memref<8x1xf32, #tpu.memory_space<vmem>>, %arg11: memref<8x1xf32, #tpu.memory_space<vmem>>, %arg12: memref<8x1xf32, #tpu.memory_space<vmem>>) attributes {dimension_semantics = [#tpu.dimension_semantics<parallel>, #tpu.dimension_semantics<arbitrary>], iteration_bounds = array<i64: 2, 1>, scalar_prefetch = 0 : i64, scratch_operands = 4 : i64, tpu.core_type = #tpu.core_type<tc>, window_params = [{transform_indices = @transform_0, window_bounds = array<i64: 8, 32>}, {pipeline_mode = #tpu.pipeline_mode<synchronous>, transform_indices = @transform_1, window_bounds = array<i64: 1, 32>}, {pipeline_mode = #tpu.pipeline_mode<synchronous>, transform_indices = @transform_2, window_bounds = array<i64: 1, 32>}, {transform_indices = @transform_3, window_bounds = array<i64: 128, 32>}, {transform_indices = @transform_4, window_bounds = array<i64: 8, 1>}, {transform_indices = @transform_5, window_bounds = array<i64: 8, 128>}, {transform_indices = @transform_6, window_bounds = array<i64: 8, 1>}]} {
    %c0_i32 = arith.constant 0 : i32
    %0 = arith.cmpi eq, %arg1, %c0_i32 : i32
    %1 = arith.extui %0 : i1 to i32
    %c0_i32_0 = arith.constant 0 : i32
    %2 = arith.cmpi ne, %1, %c0_i32_0 : i32
    scf.if %2 {
      %c0_28 = arith.constant 0 : index
      %c0_29 = arith.constant 0 : index
      %42 = vector.load %arg2[%c0_28, %c0_29] : memref<8x32xf32, #tpu.memory_space<vmem>>, vector<8x32xf32>
      %c0_30 = arith.constant 0 : index
      %c0_31 = arith.constant 0 : index
      %43 = vector.load %arg3[%c0_30, %c0_31] : memref<1x32xf32, #tpu.memory_space<vmem>>, vector<1x32xf32>
      %c0_32 = arith.constant 0 : index
      %c0_33 = arith.constant 0 : index
      %44 = vector.load %arg4[%c0_32, %c0_33] : memref<1x32xf32, #tpu.memory_space<vmem>>, vector<1x32xf32>
      %cst_34 = arith.constant dense<0.000000e+00> : vector<8xf32>
      %45 = vector.multi_reduction <add>, %42, %cst_34 [1] : vector<8x32xf32> to vector<8xf32>
      %46 = vector.shape_cast %45 : vector<8xf32> to vector<8x1xf32>
      %cst_35 = arith.constant 3.200000e+01 : f32
      %47 = vector.broadcast %cst_35 : f32 to vector<8x1xf32>
      %48 = arith.divf %46, %47 : vector<8x1xf32>
      %49 = vector.broadcast %48 : vector<8x1xf32> to vector<8x32xf32>
      %50 = arith.subf %42, %49 : vector<8x32xf32>
      %51 = arith.mulf %50, %50 : vector<8x32xf32>
      %cst_36 = arith.constant dense<0.000000e+00> : vector<8xf32>
      %52 = vector.multi_reduction <add>, %51, %cst_36 [1] : vector<8x32xf32> to vector<8xf32>
      %53 = vector.shape_cast %52 : vector<8xf32> to vector<8x1xf32>
      %cst_37 = arith.constant 3.200000e+01 : f32
      %54 = vector.broadcast %cst_37 : f32 to vector<8x1xf32>
      %55 = arith.divf %53, %54 : vector<8x1xf32>
      %56 = vector.broadcast %48 : vector<8x1xf32> to vector<8x32xf32>
      %57 = arith.subf %42, %56 : vector<8x32xf32>
      %cst_38 = arith.constant 9.99999974E-6 : f32
      %58 = vector.broadcast %cst_38 : f32 to vector<8x1xf32>
      %59 = arith.addf %55, %58 : vector<8x1xf32>
      %60 = math.rsqrt %59 : vector<8x1xf32>
      %61 = vector.broadcast %60 : vector<8x1xf32> to vector<8x32xf32>
      %62 = arith.mulf %57, %61 : vector<8x32xf32>
      %63 = vector.broadcast %43 : vector<1x32xf32> to vector<8x32xf32>
      %64 = arith.mulf %62, %63 : vector<8x32xf32>
      %65 = vector.broadcast %44 : vector<1x32xf32> to vector<8x32xf32>
      %66 = arith.addf %64, %65 : vector<8x32xf32>
      %67 = arith.truncf %66 : vector<8x32xf32> to vector<8x32xbf16>
      %c0_39 = arith.constant 0 : index
      %c0_40 = arith.constant 0 : index
      %68 = vector.load %arg9[%c0_39, %c0_40] : memref<8x32xbf16, #tpu.memory_space<vmem>>, vector<8x32xbf16>
      tpu.vector_store %arg9[%c0_39, %c0_40], %67 {strides = array<i32>} : memref<8x32xbf16, #tpu.memory_space<vmem>>, vector<8x32xbf16>,
      %cst_41 = arith.constant 0xFF800000 : f32
      %69 = vector.broadcast %cst_41 : f32 to vector<8x1xf32>
      %c0_42 = arith.constant 0 : index
      %c0_43 = arith.constant 0 : index
      %70 = vector.load %arg10[%c0_42, %c0_43] : memref<8x1xf32, #tpu.memory_space<vmem>>, vector<8x1xf32>
      tpu.vector_store %arg10[%c0_42, %c0_43], %69 {strides = array<i32>} : memref<8x1xf32, #tpu.memory_space<vmem>>, vector<8x1xf32>,
      %cst_44 = arith.constant 0.000000e+00 : f32
      %71 = vector.broadcast %cst_44 : f32 to vector<8x1xf32>
      %c0_45 = arith.constant 0 : index
      %c0_46 = arith.constant 0 : index
      %72 = vector.load %arg11[%c0_45, %c0_46] : memref<8x1xf32, #tpu.memory_space<vmem>>, vector<8x1xf32>
      tpu.vector_store %arg11[%c0_45, %c0_46], %71 {strides = array<i32>} : memref<8x1xf32, #tpu.memory_space<vmem>>, vector<8x1xf32>,
      %cst_47 = arith.constant 0.000000e+00 : f32
      %73 = vector.broadcast %cst_47 : f32 to vector<8x1xf32>
      %c0_48 = arith.constant 0 : index
      %c0_49 = arith.constant 0 : index
      %74 = vector.load %arg12[%c0_48, %c0_49] : memref<8x1xf32, #tpu.memory_space<vmem>>, vector<8x1xf32>
      tpu.vector_store %arg12[%c0_48, %c0_49], %73 {strides = array<i32>} : memref<8x1xf32, #tpu.memory_space<vmem>>, vector<8x1xf32>,
    } else {
    }
    %c0 = arith.constant 0 : index
    %c0_1 = arith.constant 0 : index
    %3 = vector.load %arg9[%c0, %c0_1] : memref<8x32xbf16, #tpu.memory_space<vmem>>, vector<8x32xbf16>
    %c0_2 = arith.constant 0 : index
    %c0_3 = arith.constant 0 : index
    %4 = vector.load %arg5[%c0_2, %c0_3] : memref<128x32xbf16, #tpu.memory_space<vmem>>, vector<128x32xbf16>
    %cst = arith.constant dense<0.000000e+00> : vector<8x128xf32>
    %5 = tpu.matmul %3, %4, %cst {dimension_numbers = #tpu.dot_dimension_numbers<[1], [1], [0], [0], [0, 0, 1, 0], [], []>} : vector<8x32xbf16>, vector<128x32xbf16>, vector<8x128xf32> -> vector<8x128xf32>
    %6 = arith.truncf %5 : vector<8x128xf32> to vector<8x128xbf16>
    %c0_4 = arith.constant 0 : index
    %c0_5 = arith.constant 0 : index
    %7 = vector.load %arg7[%c0_4, %c0_5] : memref<8x128xbf16, #tpu.memory_space<vmem>>, vector<8x128xbf16>
    tpu.vector_store %arg7[%c0_4, %c0_5], %6 {strides = array<i32>} : memref<8x128xbf16, #tpu.memory_space<vmem>>, vector<8x128xbf16>,
    %c0_6 = arith.constant 0 : index
    %c0_7 = arith.constant 0 : index
    %8 = vector.load %arg6[%c0_6, %c0_7] : memref<8x1xi32, #tpu.memory_space<vmem>>, vector<8x1xi32>
    %9 = tpu.iota {dimensions = array<i32: 1>} : vector<8x128xi32>
    %c128_i32 = arith.constant 128 : i32
    %10 = arith.muli %arg1, %c128_i32 : i32
    %11 = vector.broadcast %10 : i32 to vector<8x128xi32>
    %12 = arith.addi %9, %11 : vector<8x128xi32>
    %c0_8 = arith.constant 0 : index
    %c0_9 = arith.constant 0 : index
    %13 = vector.load %arg12[%c0_8, %c0_9] : memref<8x1xf32, #tpu.memory_space<vmem>>, vector<8x1xf32>
    %14 = vector.broadcast %8 : vector<8x1xi32> to vector<8x128xi32>
    %15 = arith.cmpi eq, %12, %14 : vector<8x128xi32>
    %cst_10 = arith.constant 0.000000e+00 : f32
    %16 = vector.broadcast %cst_10 : f32 to vector<8x128xf32>
    %17 = arith.select %15, %5, %16 : vector<8x128xi1>, vector<8x128xf32>
    %cst_11 = arith.constant dense<0.000000e+00> : vector<8xf32>
    %18 = vector.multi_reduction <add>, %17, %cst_11 [1] : vector<8x128xf32> to vector<8xf32>
    %19 = vector.shape_cast %18 : vector<8xf32> to vector<8x1xf32>
    %20 = arith.addf %13, %19 : vector<8x1xf32>
    %c0_12 = arith.constant 0 : index
    %c0_13 = arith.constant 0 : index
    %21 = vector.load %arg12[%c0_12, %c0_13] : memref<8x1xf32, #tpu.memory_space<vmem>>, vector<8x1xf32>
    tpu.vector_store %arg12[%c0_12, %c0_13], %20 {strides = array<i32>} : memref<8x1xf32, #tpu.memory_space<vmem>>, vector<8x1xf32>,
    %c0_14 = arith.constant 0 : index
    %c0_15 = arith.constant 0 : index
    %22 = vector.load %arg10[%c0_14, %c0_15] : memref<8x1xf32, #tpu.memory_space<vmem>>, vector<8x1xf32>
    %cst_16 = arith.constant dense<0xFF800000> : vector<8xf32>
    %23 = vector.multi_reduction <maximumf>, %5, %cst_16 [1] : vector<8x128xf32> to vector<8xf32>
    %24 = vector.shape_cast %23 : vector<8xf32> to vector<8x1xf32>
    %25 = arith.maximumf %22, %24 : vector<8x1xf32>
    %c0_17 = arith.constant 0 : index
    %c0_18 = arith.constant 0 : index
    %26 = vector.load %arg11[%c0_17, %c0_18] : memref<8x1xf32, #tpu.memory_space<vmem>>, vector<8x1xf32>
    %c0_19 = arith.constant 0 : index
    %c0_20 = arith.constant 0 : index
    %27 = vector.load %arg10[%c0_19, %c0_20] : memref<8x1xf32, #tpu.memory_space<vmem>>, vector<8x1xf32>
    %28 = arith.subf %27, %25 : vector<8x1xf32>
    %29 = math.exp %28 : vector<8x1xf32>
    %30 = arith.mulf %26, %29 : vector<8x1xf32>
    %31 = vector.broadcast %25 : vector<8x1xf32> to vector<8x128xf32>
    %32 = arith.subf %5, %31 : vector<8x128xf32>
    %33 = math.exp %32 : vector<8x128xf32>
    %cst_21 = arith.constant dense<0.000000e+00> : vector<8xf32>
    %34 = vector.multi_reduction <add>, %33, %cst_21 [1] : vector<8x128xf32> to vector<8xf32>
    %35 = vector.shape_cast %34 : vector<8xf32> to vector<8x1xf32>
    %36 = arith.addf %30, %35 : vector<8x1xf32>
    %c0_22 = arith.constant 0 : index
    %c0_23 = arith.constant 0 : index
    %37 = vector.load %arg11[%c0_22, %c0_23] : memref<8x1xf32, #tpu.memory_space<vmem>>, vector<8x1xf32>
    tpu.vector_store %arg11[%c0_22, %c0_23], %36 {strides = array<i32>} : memref<8x1xf32, #tpu.memory_space<vmem>>, vector<8x1xf32>,
    %c0_24 = arith.constant 0 : index
    %c0_25 = arith.constant 0 : index
    %38 = vector.load %arg10[%c0_24, %c0_25] : memref<8x1xf32, #tpu.memory_space<vmem>>, vector<8x1xf32>
    tpu.vector_store %arg10[%c0_24, %c0_25], %25 {strides = array<i32>} : memref<8x1xf32, #tpu.memory_space<vmem>>, vector<8x1xf32>,
    %c0_i32_26 = arith.constant 0 : i32
    %39 = arith.cmpi eq, %arg1, %c0_i32_26 : i32
    %40 = arith.extui %39 : i1 to i32
    %c0_i32_27 = arith.constant 0 : i32
    %41 = arith.cmpi ne, %40, %c0_i32_27 : i32
    scf.if %41 {
      %c-100_i32 = arith.constant -100 : i32
      %42 = vector.broadcast %c-100_i32 : i32 to vector<8x1xi32>
      %43 = arith.cmpi ne, %8, %42 : vector<8x1xi32>
      %44 = arith.extui %43 : vector<8x1xi1> to vector<8x1xi32>
      %45 = arith.sitofp %44 : vector<8x1xi32> to vector<8x1xf32>
      %c0_28 = arith.constant 0 : index
      %c0_29 = arith.constant 0 : index
      %46 = vector.load %arg10[%c0_28, %c0_29] : memref<8x1xf32, #tpu.memory_space<vmem>>, vector<8x1xf32>
      %c0_30 = arith.constant 0 : index
      %c0_31 = arith.constant 0 : index
      %47 = vector.load %arg11[%c0_30, %c0_31] : memref<8x1xf32, #tpu.memory_space<vmem>>, vector<8x1xf32>
      %48 = math.log %47 : vector<8x1xf32>
      %49 = arith.addf %46, %48 : vector<8x1xf32>
      %c0_32 = arith.constant 0 : index
      %c0_33 = arith.constant 0 : index
      %50 = vector.load %arg12[%c0_32, %c0_33] : memref<8x1xf32, #tpu.memory_space<vmem>>, vector<8x1xf32>
      %51 = arith.subf %49, %50 : vector<8x1xf32>
      %52 = arith.mulf %51, %45 : vector<8x1xf32>
      %c0_34 = arith.constant 0 : index
      %c0_35 = arith.constant 0 : index
      %53 = vector.load %arg8[%c0_34, %c0_35] : memref<8x1xf32, #tpu.memory_space<vmem>>, vector<8x1xf32>
      tpu.vector_store %arg8[%c0_34, %c0_35], %52 {strides = array<i32>} : memref<8x1xf32, #tpu.memory_space<vmem>>, vector<8x1xf32>,
    } else {
    }
    return
  }
  func.func @transform_0(%arg0: i32, %arg1: i32) -> (i32, i32) {
    %c0_i32 = arith.constant 0 : i32
    %c0_i32_0 = arith.constant 0 : i32
    return %arg0, %c0_i32 : i32, i32
  }
  func.func @transform_1(%arg0: i32, %arg1: i32) -> (i32, i32) {
    %c0_i32 = arith.constant 0 : i32
    %c0_i32_0 = arith.constant 0 : i32
    %c0_i32_1 = arith.constant 0 : i32
    return %c0_i32, %c0_i32_0 : i32, i32
  }
  func.func @transform_2(%arg0: i32, %arg1: i32) -> (i32, i32) {
    %c0_i32 = arith.constant 0 : i32
    %c0_i32_0 = arith.constant 0 : i32
    %c0_i32_1 = arith.constant 0 : i32
    return %c0_i32, %c0_i32_0 : i32, i32
  }
  func.func @transform_3(%arg0: i32, %arg1: i32) -> (i32, i32) {
    %c0_i32 = arith.constant 0 : i32
    %c0_i32_0 = arith.constant 0 : i32
    return %arg1, %c0_i32 : i32, i32
  }
  func.func @transform_4(%arg0: i32, %arg1: i32) -> (i32, i32) {
    %c0_i32 = arith.constant 0 : i32
    %c0_i32_0 = arith.constant 0 : i32
    return %arg0, %c0_i32 : i32, i32
  }
  func.func @transform_5(%arg0: i32, %arg1: i32) -> (i32, i32) {
    %c0_i32 = arith.constant 0 : i32
    return %arg0, %arg1 : i32, i32
  }
  func.func @transform_6(%arg0: i32, %arg1: i32) -> (i32, i32) {
    %c0_i32 = arith.constant 0 : i32
    %c0_i32_0 = arith.constant 0 : i32
    return %arg0, %c0_i32 : i32, i32
  }
}

module attributes {stable_mosaic.version = 11 : i64} {
  func.func @_block_kernel(%arg0: i32, %arg1: memref<16x32xf32, #tpu.memory_space<vmem>>, %arg2: memref<2x1x8xf32, #tpu.memory_space<vmem>>, %arg3: memref<1x32xf32, #tpu.memory_space<vmem>>, %arg4: memref<1x32xf32, #tpu.memory_space<vmem>>, %arg5: memref<32x96xbf16, #tpu.memory_space<vmem>>, %arg6: memref<1x96xf32, #tpu.memory_space<vmem>>, %arg7: memref<32x32xbf16, #tpu.memory_space<vmem>>, %arg8: memref<1x32xf32, #tpu.memory_space<vmem>>, %arg9: memref<1x32xf32, #tpu.memory_space<vmem>>, %arg10: memref<1x32xf32, #tpu.memory_space<vmem>>, %arg11: memref<32x128xbf16, #tpu.memory_space<vmem>>, %arg12: memref<1x128xf32, #tpu.memory_space<vmem>>, %arg13: memref<128x32xbf16, #tpu.memory_space<vmem>>, %arg14: memref<1x32xf32, #tpu.memory_space<vmem>>, %arg15: memref<16x32xf32, #tpu.memory_space<vmem>>) attributes {dimension_semantics = [#tpu.dimension_semantics<parallel>], iteration_bounds = array<i64: 1>, scalar_prefetch = 0 : i64, scratch_operands = 0 : i64, tpu.core_type = #tpu.core_type<tc>, window_params = [{transform_indices = @transform_0, window_bounds = array<i64: 16, 32>}, {transform_indices = @transform_1, window_bounds = array<i64: 2, 1, 8>}, {pipeline_mode = #tpu.pipeline_mode<synchronous>, transform_indices = @transform_2, window_bounds = array<i64: 1, 32>}, {pipeline_mode = #tpu.pipeline_mode<synchronous>, transform_indices = @transform_3, window_bounds = array<i64: 1, 32>}, {pipeline_mode = #tpu.pipeline_mode<synchronous>, transform_indices = @transform_4, window_bounds = array<i64: 32, 96>}, {pipeline_mode = #tpu.pipeline_mode<synchronous>, transform_indices = @transform_5, window_bounds = array<i64: 1, 96>}, {pipeline_mode = #tpu.pipeline_mode<synchronous>, transform_indices = @transform_6, window_bounds = array<i64: 32, 32>}, {pipeline_mode = #tpu.pipeline_mode<synchronous>, transform_indices = @transform_7, window_bounds = array<i64: 1, 32>}, {pipeline_mode = #tpu.pipeline_mode<synchronous>, transform_indices = @transform_8, window_bounds = array<i64: 1, 32>}, {pipeline_mode = #tpu.pipeline_mode<synchronous>, transform_indices = @transform_9, window_bounds = array<i64: 1, 32>}, {pipeline_mode = #tpu.pipeline_mode<synchronous>, transform_indices = @transform_10, window_bounds = array<i64: 32, 128>}, {pipeline_mode = #tpu.pipeline_mode<synchronous>, transform_indices = @transform_11, window_bounds = array<i64: 1, 128>}, {pipeline_mode = #tpu.pipeline_mode<synchronous>, transform_indices = @transform_12, window_bounds = array<i64: 128, 32>}, {pipeline_mode = #tpu.pipeline_mode<synchronous>, transform_indices = @transform_13, window_bounds = array<i64: 1, 32>}, {transform_indices = @transform_14, window_bounds = array<i64: 16, 32>}]} {
    %c0 = arith.constant 0 : index
    %c0_0 = arith.constant 0 : index
    %0 = vector.load %arg1[%c0, %c0_0] : memref<16x32xf32, #tpu.memory_space<vmem>>, vector<16x32xf32>
    %c0_1 = arith.constant 0 : index
    %c0_2 = arith.constant 0 : index
    %1 = vector.load %arg3[%c0_1, %c0_2] : memref<1x32xf32, #tpu.memory_space<vmem>>, vector<1x32xf32>
    %c0_3 = arith.constant 0 : index
    %c0_4 = arith.constant 0 : index
    %2 = vector.load %arg4[%c0_3, %c0_4] : memref<1x32xf32, #tpu.memory_space<vmem>>, vector<1x32xf32>
    %cst = arith.constant dense<0.000000e+00> : vector<16xf32>
    %3 = vector.multi_reduction <add>, %0, %cst [1] : vector<16x32xf32> to vector<16xf32>
    %4 = vector.shape_cast %3 : vector<16xf32> to vector<16x1xf32>
    %cst_5 = arith.constant 3.200000e+01 : f32
    %5 = vector.broadcast %cst_5 : f32 to vector<16x1xf32>
    %6 = arith.divf %4, %5 : vector<16x1xf32>
    %7 = vector.broadcast %6 : vector<16x1xf32> to vector<16x32xf32>
    %8 = arith.subf %0, %7 : vector<16x32xf32>
    %9 = arith.mulf %8, %8 : vector<16x32xf32>
    %cst_6 = arith.constant dense<0.000000e+00> : vector<16xf32>
    %10 = vector.multi_reduction <add>, %9, %cst_6 [1] : vector<16x32xf32> to vector<16xf32>
    %11 = vector.shape_cast %10 : vector<16xf32> to vector<16x1xf32>
    %cst_7 = arith.constant 3.200000e+01 : f32
    %12 = vector.broadcast %cst_7 : f32 to vector<16x1xf32>
    %13 = arith.divf %11, %12 : vector<16x1xf32>
    %14 = vector.broadcast %6 : vector<16x1xf32> to vector<16x32xf32>
    %15 = arith.subf %0, %14 : vector<16x32xf32>
    %cst_8 = arith.constant 9.99999974E-6 : f32
    %16 = vector.broadcast %cst_8 : f32 to vector<16x1xf32>
    %17 = arith.addf %13, %16 : vector<16x1xf32>
    %18 = math.rsqrt %17 : vector<16x1xf32>
    %19 = vector.broadcast %18 : vector<16x1xf32> to vector<16x32xf32>
    %20 = arith.mulf %15, %19 : vector<16x32xf32>
    %21 = vector.broadcast %1 : vector<1x32xf32> to vector<16x32xf32>
    %22 = arith.mulf %20, %21 : vector<16x32xf32>
    %23 = vector.broadcast %2 : vector<1x32xf32> to vector<16x32xf32>
    %24 = arith.addf %22, %23 : vector<16x32xf32>
    %25 = arith.truncf %24 : vector<16x32xf32> to vector<16x32xbf16>
    %c0_9 = arith.constant 0 : index
    %c0_10 = arith.constant 0 : index
    %26 = vector.load %arg5[%c0_9, %c0_10] : memref<32x96xbf16, #tpu.memory_space<vmem>>, vector<32x96xbf16>
    %cst_11 = arith.constant dense<0.000000e+00> : vector<16x96xf32>
    %27 = tpu.matmul %25, %26, %cst_11 {dimension_numbers = #tpu.dot_dimension_numbers<[1], [0], [0], [1], [0, 0, 1, 1], [], []>} : vector<16x32xbf16>, vector<32x96xbf16>, vector<16x96xf32> -> vector<16x96xf32>
    %c0_12 = arith.constant 0 : index
    %c0_13 = arith.constant 0 : index
    %28 = vector.load %arg6[%c0_12, %c0_13] : memref<1x96xf32, #tpu.memory_space<vmem>>, vector<1x96xf32>
    %29 = vector.broadcast %28 : vector<1x96xf32> to vector<16x96xf32>
    %30 = arith.addf %27, %29 : vector<16x96xf32>
    %31 = tpu.iota {dimensions = array<i32: 0>} : vector<8x8xi32>
    %32 = tpu.iota {dimensions = array<i32: 1>} : vector<8x8xi32>
    %33 = arith.cmpi sge, %31, %32 : vector<8x8xi32>
    %34 = vector.extract_strided_slice %30 {offsets = [0, 0], sizes = [8, 96], strides = [1, 1]} : vector<16x96xf32> to vector<8x96xf32>
    %c0_14 = arith.constant 0 : index
    %c0_15 = arith.constant 0 : index
    %c0_16 = arith.constant 0 : index
    %35 = vector.load %arg2[%c0_14, %c0_15, %c0_16] : memref<2x1x8xf32, #tpu.memory_space<vmem>>, vector<1x1x8xf32>
    %36 = vector.shape_cast %35 : vector<1x1x8xf32> to vector<1x8xf32>
    %cst_17 = arith.constant 0.000000e+00 : f32
    %37 = vector.broadcast %cst_17 : f32 to vector<1x8xf32>
    %38 = arith.cmpf ogt, %36, %37 : vector<1x8xf32>
    %39 = vector.broadcast %38 : vector<1x8xi1> to vector<8x8xi1>
    %40 = arith.andi %33, %39 : vector<8x8xi1>
    %cst_18 = arith.constant 0.000000e+00 : f32
    %cst_19 = arith.constant -1.000000e+09 : f32
    %41 = vector.broadcast %cst_18 : f32 to vector<8x8xf32>
    %42 = vector.broadcast %cst_19 : f32 to vector<8x8xf32>
    %43 = arith.select %40, %41, %42 : vector<8x8xi1>, vector<8x8xf32>
    %44 = vector.extract_strided_slice %34 {offsets = [0, 0], sizes = [8, 16], strides = [1, 1]} : vector<8x96xf32> to vector<8x16xf32>
    %45 = arith.truncf %44 : vector<8x16xf32> to vector<8x16xbf16>
    %46 = vector.extract_strided_slice %34 {offsets = [0, 32], sizes = [8, 16], strides = [1, 1]} : vector<8x96xf32> to vector<8x16xf32>
    %47 = arith.truncf %46 : vector<8x16xf32> to vector<8x16xbf16>
    %48 = vector.extract_strided_slice %34 {offsets = [0, 64], sizes = [8, 16], strides = [1, 1]} : vector<8x96xf32> to vector<8x16xf32>
    %49 = arith.truncf %48 : vector<8x16xf32> to vector<8x16xbf16>
    %cst_20 = arith.constant dense<0.000000e+00> : vector<8x8xf32>
    %50 = tpu.matmul %45, %47, %cst_20 {dimension_numbers = #tpu.dot_dimension_numbers<[1], [1], [0], [0], [0, 0, 1, 0], [], []>} : vector<8x16xbf16>, vector<8x16xbf16>, vector<8x8xf32> -> vector<8x8xf32>
    %cst_21 = arith.constant 2.500000e-01 : f32
    %51 = vector.broadcast %cst_21 : f32 to vector<8x8xf32>
    %52 = arith.mulf %50, %51 : vector<8x8xf32>
    %53 = arith.addf %52, %43 : vector<8x8xf32>
    %cst_22 = arith.constant dense<0xFF800000> : vector<8xf32>
    %54 = vector.multi_reduction <maximumf>, %53, %cst_22 [1] : vector<8x8xf32> to vector<8xf32>
    %55 = vector.shape_cast %54 : vector<8xf32> to vector<8x1xf32>
    %56 = vector.broadcast %55 : vector<8x1xf32> to vector<8x8xf32>
    %57 = arith.subf %53, %56 : vector<8x8xf32>
    %58 = math.exp %57 : vector<8x8xf32>
    %cst_23 = arith.constant dense<0.000000e+00> : vector<8xf32>
    %59 = vector.multi_reduction <add>, %58, %cst_23 [1] : vector<8x8xf32> to vector<8xf32>
    %60 = vector.shape_cast %59 : vector<8xf32> to vector<8x1xf32>
    %61 = vector.broadcast %60 : vector<8x1xf32> to vector<8x8xf32>
    %62 = arith.divf %58, %61 : vector<8x8xf32>
    %63 = arith.truncf %62 : vector<8x8xf32> to vector<8x8xbf16>
    %cst_24 = arith.constant dense<0.000000e+00> : vector<8x16xf32>
    %64 = tpu.matmul %63, %49, %cst_24 {dimension_numbers = #tpu.dot_dimension_numbers<[1], [0], [0], [1], [0, 0, 1, 1], [], []>} : vector<8x8xbf16>, vector<8x16xbf16>, vector<8x16xf32> -> vector<8x16xf32>
    %65 = vector.extract_strided_slice %34 {offsets = [0, 16], sizes = [8, 16], strides = [1, 1]} : vector<8x96xf32> to vector<8x16xf32>
    %66 = arith.truncf %65 : vector<8x16xf32> to vector<8x16xbf16>
    %67 = vector.extract_strided_slice %34 {offsets = [0, 48], sizes = [8, 16], strides = [1, 1]} : vector<8x96xf32> to vector<8x16xf32>
    %68 = arith.truncf %67 : vector<8x16xf32> to vector<8x16xbf16>
    %69 = vector.extract_strided_slice %34 {offsets = [0, 80], sizes = [8, 16], strides = [1, 1]} : vector<8x96xf32> to vector<8x16xf32>
    %70 = arith.truncf %69 : vector<8x16xf32> to vector<8x16xbf16>
    %cst_25 = arith.constant dense<0.000000e+00> : vector<8x8xf32>
    %71 = tpu.matmul %66, %68, %cst_25 {dimension_numbers = #tpu.dot_dimension_numbers<[1], [1], [0], [0], [0, 0, 1, 0], [], []>} : vector<8x16xbf16>, vector<8x16xbf16>, vector<8x8xf32> -> vector<8x8xf32>
    %cst_26 = arith.constant 2.500000e-01 : f32
    %72 = vector.broadcast %cst_26 : f32 to vector<8x8xf32>
    %73 = arith.mulf %71, %72 : vector<8x8xf32>
    %74 = arith.addf %73, %43 : vector<8x8xf32>
    %cst_27 = arith.constant dense<0xFF800000> : vector<8xf32>
    %75 = vector.multi_reduction <maximumf>, %74, %cst_27 [1] : vector<8x8xf32> to vector<8xf32>
    %76 = vector.shape_cast %75 : vector<8xf32> to vector<8x1xf32>
    %77 = vector.broadcast %76 : vector<8x1xf32> to vector<8x8xf32>
    %78 = arith.subf %74, %77 : vector<8x8xf32>
    %79 = math.exp %78 : vector<8x8xf32>
    %cst_28 = arith.constant dense<0.000000e+00> : vector<8xf32>
    %80 = vector.multi_reduction <add>, %79, %cst_28 [1] : vector<8x8xf32> to vector<8xf32>
    %81 = vector.shape_cast %80 : vector<8xf32> to vector<8x1xf32>
    %82 = vector.broadcast %81 : vector<8x1xf32> to vector<8x8xf32>
    %83 = arith.divf %79, %82 : vector<8x8xf32>
    %84 = arith.truncf %83 : vector<8x8xf32> to vector<8x8xbf16>
    %cst_29 = arith.constant dense<0.000000e+00> : vector<8x16xf32>
    %85 = tpu.matmul %84, %70, %cst_29 {dimension_numbers = #tpu.dot_dimension_numbers<[1], [0], [0], [1], [0, 0, 1, 1], [], []>} : vector<8x8xbf16>, vector<8x16xbf16>, vector<8x16xf32> -> vector<8x16xf32>
    %86 = tpu.concatenate %64, %85 in 1 : vector<8x16xf32>, vector<8x16xf32> -> vector<8x32xf32>
    %87 = vector.extract_strided_slice %30 {offsets = [8, 0], sizes = [8, 96], strides = [1, 1]} : vector<16x96xf32> to vector<8x96xf32>
    %c1 = arith.constant 1 : index
    %c0_30 = arith.constant 0 : index
    %c0_31 = arith.constant 0 : index
    %88 = vector.load %arg2[%c1, %c0_30, %c0_31] : memref<2x1x8xf32, #tpu.memory_space<vmem>>, vector<1x1x8xf32>
    %89 = vector.shape_cast %88 : vector<1x1x8xf32> to vector<1x8xf32>
    %cst_32 = arith.constant 0.000000e+00 : f32
    %90 = vector.broadcast %cst_32 : f32 to vector<1x8xf32>
    %91 = arith.cmpf ogt, %89, %90 : vector<1x8xf32>
    %92 = vector.broadcast %91 : vector<1x8xi1> to vector<8x8xi1>
    %93 = arith.andi %33, %92 : vector<8x8xi1>
    %cst_33 = arith.constant 0.000000e+00 : f32
    %cst_34 = arith.constant -1.000000e+09 : f32
    %94 = vector.broadcast %cst_33 : f32 to vector<8x8xf32>
    %95 = vector.broadcast %cst_34 : f32 to vector<8x8xf32>
    %96 = arith.select %93, %94, %95 : vector<8x8xi1>, vector<8x8xf32>
    %97 = vector.extract_strided_slice %87 {offsets = [0, 0], sizes = [8, 16], strides = [1, 1]} : vector<8x96xf32> to vector<8x16xf32>
    %98 = arith.truncf %97 : vector<8x16xf32> to vector<8x16xbf16>
    %99 = vector.extract_strided_slice %87 {offsets = [0, 32], sizes = [8, 16], strides = [1, 1]} : vector<8x96xf32> to vector<8x16xf32>
    %100 = arith.truncf %99 : vector<8x16xf32> to vector<8x16xbf16>
    %101 = vector.extract_strided_slice %87 {offsets = [0, 64], sizes = [8, 16], strides = [1, 1]} : vector<8x96xf32> to vector<8x16xf32>
    %102 = arith.truncf %101 : vector<8x16xf32> to vector<8x16xbf16>
    %cst_35 = arith.constant dense<0.000000e+00> : vector<8x8xf32>
    %103 = tpu.matmul %98, %100, %cst_35 {dimension_numbers = #tpu.dot_dimension_numbers<[1], [1], [0], [0], [0, 0, 1, 0], [], []>} : vector<8x16xbf16>, vector<8x16xbf16>, vector<8x8xf32> -> vector<8x8xf32>
    %cst_36 = arith.constant 2.500000e-01 : f32
    %104 = vector.broadcast %cst_36 : f32 to vector<8x8xf32>
    %105 = arith.mulf %103, %104 : vector<8x8xf32>
    %106 = arith.addf %105, %96 : vector<8x8xf32>
    %cst_37 = arith.constant dense<0xFF800000> : vector<8xf32>
    %107 = vector.multi_reduction <maximumf>, %106, %cst_37 [1] : vector<8x8xf32> to vector<8xf32>
    %108 = vector.shape_cast %107 : vector<8xf32> to vector<8x1xf32>
    %109 = vector.broadcast %108 : vector<8x1xf32> to vector<8x8xf32>
    %110 = arith.subf %106, %109 : vector<8x8xf32>
    %111 = math.exp %110 : vector<8x8xf32>
    %cst_38 = arith.constant dense<0.000000e+00> : vector<8xf32>
    %112 = vector.multi_reduction <add>, %111, %cst_38 [1] : vector<8x8xf32> to vector<8xf32>
    %113 = vector.shape_cast %112 : vector<8xf32> to vector<8x1xf32>
    %114 = vector.broadcast %113 : vector<8x1xf32> to vector<8x8xf32>
    %115 = arith.divf %111, %114 : vector<8x8xf32>
    %116 = arith.truncf %115 : vector<8x8xf32> to vector<8x8xbf16>
    %cst_39 = arith.constant dense<0.000000e+00> : vector<8x16xf32>
    %117 = tpu.matmul %116, %102, %cst_39 {dimension_numbers = #tpu.dot_dimension_numbers<[1], [0], [0], [1], [0, 0, 1, 1], [], []>} : vector<8x8xbf16>, vector<8x16xbf16>, vector<8x16xf32> -> vector<8x16xf32>
    %118 = vector.extract_strided_slice %87 {offsets = [0, 16], sizes = [8, 16], strides = [1, 1]} : vector<8x96xf32> to vector<8x16xf32>
    %119 = arith.truncf %118 : vector<8x16xf32> to vector<8x16xbf16>
    %120 = vector.extract_strided_slice %87 {offsets = [0, 48], sizes = [8, 16], strides = [1, 1]} : vector<8x96xf32> to vector<8x16xf32>
    %121 = arith.truncf %120 : vector<8x16xf32> to vector<8x16xbf16>
    %122 = vector.extract_strided_slice %87 {offsets = [0, 80], sizes = [8, 16], strides = [1, 1]} : vector<8x96xf32> to vector<8x16xf32>
    %123 = arith.truncf %122 : vector<8x16xf32> to vector<8x16xbf16>
    %cst_40 = arith.constant dense<0.000000e+00> : vector<8x8xf32>
    %124 = tpu.matmul %119, %121, %cst_40 {dimension_numbers = #tpu.dot_dimension_numbers<[1], [1], [0], [0], [0, 0, 1, 0], [], []>} : vector<8x16xbf16>, vector<8x16xbf16>, vector<8x8xf32> -> vector<8x8xf32>
    %cst_41 = arith.constant 2.500000e-01 : f32
    %125 = vector.broadcast %cst_41 : f32 to vector<8x8xf32>
    %126 = arith.mulf %124, %125 : vector<8x8xf32>
    %127 = arith.addf %126, %96 : vector<8x8xf32>
    %cst_42 = arith.constant dense<0xFF800000> : vector<8xf32>
    %128 = vector.multi_reduction <maximumf>, %127, %cst_42 [1] : vector<8x8xf32> to vector<8xf32>
    %129 = vector.shape_cast %128 : vector<8xf32> to vector<8x1xf32>
    %130 = vector.broadcast %129 : vector<8x1xf32> to vector<8x8xf32>
    %131 = arith.subf %127, %130 : vector<8x8xf32>
    %132 = math.exp %131 : vector<8x8xf32>
    %cst_43 = arith.constant dense<0.000000e+00> : vector<8xf32>
    %133 = vector.multi_reduction <add>, %132, %cst_43 [1] : vector<8x8xf32> to vector<8xf32>
    %134 = vector.shape_cast %133 : vector<8xf32> to vector<8x1xf32>
    %135 = vector.broadcast %134 : vector<8x1xf32> to vector<8x8xf32>
    %136 = arith.divf %132, %135 : vector<8x8xf32>
    %137 = arith.truncf %136 : vector<8x8xf32> to vector<8x8xbf16>
    %cst_44 = arith.constant dense<0.000000e+00> : vector<8x16xf32>
    %138 = tpu.matmul %137, %123, %cst_44 {dimension_numbers = #tpu.dot_dimension_numbers<[1], [0], [0], [1], [0, 0, 1, 1], [], []>} : vector<8x8xbf16>, vector<8x16xbf16>, vector<8x16xf32> -> vector<8x16xf32>
    %139 = tpu.concatenate %117, %138 in 1 : vector<8x16xf32>, vector<8x16xf32> -> vector<8x32xf32>
    %140 = tpu.concatenate %86, %139 in 0 : vector<8x32xf32>, vector<8x32xf32> -> vector<16x32xf32>
    %141 = arith.truncf %140 : vector<16x32xf32> to vector<16x32xbf16>
    %c0_45 = arith.constant 0 : index
    %c0_46 = arith.constant 0 : index
    %142 = vector.load %arg7[%c0_45, %c0_46] : memref<32x32xbf16, #tpu.memory_space<vmem>>, vector<32x32xbf16>
    %cst_47 = arith.constant dense<0.000000e+00> : vector<16x32xf32>
    %143 = tpu.matmul %141, %142, %cst_47 {dimension_numbers = #tpu.dot_dimension_numbers<[1], [0], [0], [1], [0, 0, 1, 1], [], []>} : vector<16x32xbf16>, vector<32x32xbf16>, vector<16x32xf32> -> vector<16x32xf32>
    %c0_48 = arith.constant 0 : index
    %c0_49 = arith.constant 0 : index
    %144 = vector.load %arg8[%c0_48, %c0_49] : memref<1x32xf32, #tpu.memory_space<vmem>>, vector<1x32xf32>
    %145 = vector.broadcast %144 : vector<1x32xf32> to vector<16x32xf32>
    %146 = arith.addf %143, %145 : vector<16x32xf32>
    %147 = arith.addf %0, %146 : vector<16x32xf32>
    %c0_50 = arith.constant 0 : index
    %c0_51 = arith.constant 0 : index
    %148 = vector.load %arg9[%c0_50, %c0_51] : memref<1x32xf32, #tpu.memory_space<vmem>>, vector<1x32xf32>
    %c0_52 = arith.constant 0 : index
    %c0_53 = arith.constant 0 : index
    %149 = vector.load %arg10[%c0_52, %c0_53] : memref<1x32xf32, #tpu.memory_space<vmem>>, vector<1x32xf32>
    %cst_54 = arith.constant dense<0.000000e+00> : vector<16xf32>
    %150 = vector.multi_reduction <add>, %147, %cst_54 [1] : vector<16x32xf32> to vector<16xf32>
    %151 = vector.shape_cast %150 : vector<16xf32> to vector<16x1xf32>
    %cst_55 = arith.constant 3.200000e+01 : f32
    %152 = vector.broadcast %cst_55 : f32 to vector<16x1xf32>
    %153 = arith.divf %151, %152 : vector<16x1xf32>
    %154 = vector.broadcast %153 : vector<16x1xf32> to vector<16x32xf32>
    %155 = arith.subf %147, %154 : vector<16x32xf32>
    %156 = arith.mulf %155, %155 : vector<16x32xf32>
    %cst_56 = arith.constant dense<0.000000e+00> : vector<16xf32>
    %157 = vector.multi_reduction <add>, %156, %cst_56 [1] : vector<16x32xf32> to vector<16xf32>
    %158 = vector.shape_cast %157 : vector<16xf32> to vector<16x1xf32>
    %cst_57 = arith.constant 3.200000e+01 : f32
    %159 = vector.broadcast %cst_57 : f32 to vector<16x1xf32>
    %160 = arith.divf %158, %159 : vector<16x1xf32>
    %161 = vector.broadcast %153 : vector<16x1xf32> to vector<16x32xf32>
    %162 = arith.subf %147, %161 : vector<16x32xf32>
    %cst_58 = arith.constant 9.99999974E-6 : f32
    %163 = vector.broadcast %cst_58 : f32 to vector<16x1xf32>
    %164 = arith.addf %160, %163 : vector<16x1xf32>
    %165 = math.rsqrt %164 : vector<16x1xf32>
    %166 = vector.broadcast %165 : vector<16x1xf32> to vector<16x32xf32>
    %167 = arith.mulf %162, %166 : vector<16x32xf32>
    %168 = vector.broadcast %148 : vector<1x32xf32> to vector<16x32xf32>
    %169 = arith.mulf %167, %168 : vector<16x32xf32>
    %170 = vector.broadcast %149 : vector<1x32xf32> to vector<16x32xf32>
    %171 = arith.addf %169, %170 : vector<16x32xf32>
    %172 = arith.truncf %171 : vector<16x32xf32> to vector<16x32xbf16>
    %c0_59 = arith.constant 0 : index
    %c0_60 = arith.constant 0 : index
    %173 = vector.load %arg11[%c0_59, %c0_60] : memref<32x128xbf16, #tpu.memory_space<vmem>>, vector<32x128xbf16>
    %cst_61 = arith.constant dense<0.000000e+00> : vector<16x128xf32>
    %174 = tpu.matmul %172, %173, %cst_61 {dimension_numbers = #tpu.dot_dimension_numbers<[1], [0], [0], [1], [0, 0, 1, 1], [], []>} : vector<16x32xbf16>, vector<32x128xbf16>, vector<16x128xf32> -> vector<16x128xf32>
    %c0_62 = arith.constant 0 : index
    %c0_63 = arith.constant 0 : index
    %175 = vector.load %arg12[%c0_62, %c0_63] : memref<1x128xf32, #tpu.memory_space<vmem>>, vector<1x128xf32>
    %176 = vector.broadcast %175 : vector<1x128xf32> to vector<16x128xf32>
    %177 = arith.addf %174, %176 : vector<16x128xf32>
    %cst_64 = arith.constant 5.000000e-01 : f32
    %178 = vector.broadcast %cst_64 : f32 to vector<16x128xf32>
    %179 = arith.mulf %178, %177 : vector<16x128xf32>
    %cst_65 = arith.constant 4.471500e-02 : f32
    %180 = vector.broadcast %cst_65 : f32 to vector<16x128xf32>
    %181 = arith.mulf %180, %177 : vector<16x128xf32>
    %182 = arith.mulf %181, %177 : vector<16x128xf32>
    %183 = arith.mulf %182, %177 : vector<16x128xf32>
    %184 = arith.addf %177, %183 : vector<16x128xf32>
    %cst_66 = arith.constant 0.797884583 : f32
    %185 = vector.broadcast %cst_66 : f32 to vector<16x128xf32>
    %186 = arith.mulf %185, %184 : vector<16x128xf32>
    %187 = math.tanh %186 : vector<16x128xf32>
    %cst_67 = arith.constant 1.000000e+00 : f32
    %188 = vector.broadcast %cst_67 : f32 to vector<16x128xf32>
    %189 = arith.addf %188, %187 : vector<16x128xf32>
    %190 = arith.mulf %179, %189 : vector<16x128xf32>
    %191 = arith.truncf %190 : vector<16x128xf32> to vector<16x128xbf16>
    %c0_68 = arith.constant 0 : index
    %c0_69 = arith.constant 0 : index
    %192 = vector.load %arg13[%c0_68, %c0_69] : memref<128x32xbf16, #tpu.memory_space<vmem>>, vector<128x32xbf16>
    %cst_70 = arith.constant dense<0.000000e+00> : vector<16x32xf32>
    %193 = tpu.matmul %191, %192, %cst_70 {dimension_numbers = #tpu.dot_dimension_numbers<[1], [0], [0], [1], [0, 0, 1, 1], [], []>} : vector<16x128xbf16>, vector<128x32xbf16>, vector<16x32xf32> -> vector<16x32xf32>
    %194 = arith.addf %147, %193 : vector<16x32xf32>
    %c0_71 = arith.constant 0 : index
    %c0_72 = arith.constant 0 : index
    %195 = vector.load %arg14[%c0_71, %c0_72] : memref<1x32xf32, #tpu.memory_space<vmem>>, vector<1x32xf32>
    %196 = vector.broadcast %195 : vector<1x32xf32> to vector<16x32xf32>
    %197 = arith.addf %194, %196 : vector<16x32xf32>
    %c0_73 = arith.constant 0 : index
    %c0_74 = arith.constant 0 : index
    %198 = vector.load %arg15[%c0_73, %c0_74] : memref<16x32xf32, #tpu.memory_space<vmem>>, vector<16x32xf32>
    tpu.vector_store %arg15[%c0_73, %c0_74], %197 {strides = array<i32>} : memref<16x32xf32, #tpu.memory_space<vmem>>, vector<16x32xf32>,
    return
  }
  func.func @transform_0(%arg0: i32) -> (i32, i32) {
    %c0_i32 = arith.constant 0 : i32
    %c0_i32_0 = arith.constant 0 : i32
    return %arg0, %c0_i32 : i32, i32
  }
  func.func @transform_1(%arg0: i32) -> (i32, i32, i32) {
    %c0_i32 = arith.constant 0 : i32
    %c0_i32_0 = arith.constant 0 : i32
    %c0_i32_1 = arith.constant 0 : i32
    return %arg0, %c0_i32, %c0_i32_0 : i32, i32, i32
  }
  func.func @transform_2(%arg0: i32) -> (i32, i32) {
    %c0_i32 = arith.constant 0 : i32
    %c0_i32_0 = arith.constant 0 : i32
    %c0_i32_1 = arith.constant 0 : i32
    return %c0_i32, %c0_i32_0 : i32, i32
  }
  func.func @transform_3(%arg0: i32) -> (i32, i32) {
    %c0_i32 = arith.constant 0 : i32
    %c0_i32_0 = arith.constant 0 : i32
    %c0_i32_1 = arith.constant 0 : i32
    return %c0_i32, %c0_i32_0 : i32, i32
  }
  func.func @transform_4(%arg0: i32) -> (i32, i32) {
    %c0_i32 = arith.constant 0 : i32
    %c0_i32_0 = arith.constant 0 : i32
    %c0_i32_1 = arith.constant 0 : i32
    return %c0_i32, %c0_i32_0 : i32, i32
  }
  func.func @transform_5(%arg0: i32) -> (i32, i32) {
    %c0_i32 = arith.constant 0 : i32
    %c0_i32_0 = arith.constant 0 : i32
    %c0_i32_1 = arith.constant 0 : i32
    return %c0_i32, %c0_i32_0 : i32, i32
  }
  func.func @transform_6(%arg0: i32) -> (i32, i32) {
    %c0_i32 = arith.constant 0 : i32
    %c0_i32_0 = arith.constant 0 : i32
    %c0_i32_1 = arith.constant 0 : i32
    return %c0_i32, %c0_i32_0 : i32, i32
  }
  func.func @transform_7(%arg0: i32) -> (i32, i32) {
    %c0_i32 = arith.constant 0 : i32
    %c0_i32_0 = arith.constant 0 : i32
    %c0_i32_1 = arith.constant 0 : i32
    return %c0_i32, %c0_i32_0 : i32, i32
  }
  func.func @transform_8(%arg0: i32) -> (i32, i32) {
    %c0_i32 = arith.constant 0 : i32
    %c0_i32_0 = arith.constant 0 : i32
    %c0_i32_1 = arith.constant 0 : i32
    return %c0_i32, %c0_i32_0 : i32, i32
  }
  func.func @transform_9(%arg0: i32) -> (i32, i32) {
    %c0_i32 = arith.constant 0 : i32
    %c0_i32_0 = arith.constant 0 : i32
    %c0_i32_1 = arith.constant 0 : i32
    return %c0_i32, %c0_i32_0 : i32, i32
  }
  func.func @transform_10(%arg0: i32) -> (i32, i32) {
    %c0_i32 = arith.constant 0 : i32
    %c0_i32_0 = arith.constant 0 : i32
    %c0_i32_1 = arith.constant 0 : i32
    return %c0_i32, %c0_i32_0 : i32, i32
  }
  func.func @transform_11(%arg0: i32) -> (i32, i32) {
    %c0_i32 = arith.constant 0 : i32
    %c0_i32_0 = arith.constant 0 : i32
    %c0_i32_1 = arith.constant 0 : i32
    return %c0_i32, %c0_i32_0 : i32, i32
  }
  func.func @transform_12(%arg0: i32) -> (i32, i32) {
    %c0_i32 = arith.constant 0 : i32
    %c0_i32_0 = arith.constant 0 : i32
    %c0_i32_1 = arith.constant 0 : i32
    return %c0_i32, %c0_i32_0 : i32, i32
  }
  func.func @transform_13(%arg0: i32) -> (i32, i32) {
    %c0_i32 = arith.constant 0 : i32
    %c0_i32_0 = arith.constant 0 : i32
    %c0_i32_1 = arith.constant 0 : i32
    return %c0_i32, %c0_i32_0 : i32, i32
  }
  func.func @transform_14(%arg0: i32) -> (i32, i32) {
    %c0_i32 = arith.constant 0 : i32
    %c0_i32_0 = arith.constant 0 : i32
    return %arg0, %c0_i32 : i32, i32
  }
}

</mosaic_0001>

<llo_original>
// kernel: gpt_forward.5
$region0: #{gpt_forward.5}
  #allocation0 [shape = 'u32[]', space=smem, size = 0x4, offset = 0x4, fixed_abs, tag = 'smem constant byte address 0x4 - core index']
  #allocation1 [shape = 'u32[144,128]{1,0:T(1,128)}', space=vmem, size = 0x12000, scoped, tag = 'internal scratch']
  #allocation2 [shape = 'bf16[8,32]{1,0:T(8,128)(2,1)}', space=vmem, size = 0x800, scoped, tag = 'scratch operand']
  #allocation3 [shape = 'f32[8,1]{1,0:T(8,128)}', space=vmem, size = 0x1000, scoped, tag = 'scratch operand']
  #allocation4 [shape = 'f32[8,1]{1,0:T(8,128)}', space=vmem, size = 0x1000, scoped, tag = 'scratch operand']
  #allocation5 [shape = 'f32[8,1]{1,0:T(8,128)}', space=vmem, size = 0x1000, scoped, tag = 'scratch operand']
  %s0 = inlined_call_operand.vmem [shape: f32[16,32], index: 0, kind: input, shape index: {}]
  %s1 = inlined_call_operand.vmem [shape: f32[1,32], index: 1, kind: input, shape index: {}]
  %s2 = inlined_call_operand.vmem [shape: f32[1,32], index: 2, kind: input, shape index: {}]
  %s3 = inlined_call_operand.vmem [shape: bf16[128,32], index: 3, kind: input, shape index: {}]
  %s4 = inlined_call_operand.vmem [shape: s32[16,1], index: 4, kind: input, shape index: {}]
  %s5 = inlined_call_operand.hbm [shape: bf16[16,128], index: 5, kind: output, shape index: {0}]
  %s6 = inlined_call_operand.vmem [shape: f32[16,1], index: 6, kind: output, shape index: {1}]
  %7 = xla_tuple %s5, %s6
  %s8 = sld [smem:[#allocation0]]
  $region69: #{gpt_forward.5} parent=0
    _
  %s10 = ssub.s32 1, %s8
  %s11 = scalar_select 0, %s10, %s8
  $region1: #{gpt_forward.5} parent=0
    #allocation6 [shape = 'u8[4096]{0}', space=vmem, size = 0x1000, scoped, tag = 'output window, operand 0']
    #allocation7 [shape = 's32[2]{0}', space=sflag, size = 0x8, scoped, tag = 'scoped memory for gpt_forward.5']
    %12 = vsyncpa [#allocation7], 0
    %s13 = scalar_lea.sflag [#allocation7], 1
    %14 = vsyncpa %s13, 0
    loop: start=0, step=1, limit=4
    $region2: #{gpt_forward.5} parent=1 // loop_pre_header
      _
    $region3: #{gpt_forward.5} parent=1 // loop_header
      %s16 = sphi 0, %s20
      %p17 = scmp.ge.s32.totalorder %s16, 4
      %s23 = sphi 0, %s35
      %s24 = sphi 0, %s31
      %s25 = sphi 0, %s23
      %s26 = sphi 0, %s24
      %s27 = sphi 0, %s25
      %s28 = sphi 0, %s26
      %s38 = sphi 0, %s40
      %s41 = sphi 0, %s38
      %s42 = sphi 0, %s41
      %s58 = sphi 0, %s42
      %s62 = sphi 0, %s62
      %s64 = sphi 0, %s62
      %s65 = sphi 0, %s64
      %s79 = sphi 0, %s65
      %s83 = sphi 0, %s83
      %s85 = sphi 0, %s83
      %s86 = sphi 0, %s85
      %s100 = sphi 0, %s86
      %s106 = sphi 0, %s108
      %s109 = sphi 0, %s106
      %s110 = sphi 0, %s109
      %s126 = sphi 0, %s110
      %s132 = sphi 0, %s134
      %s135 = sphi 0, %s132
      %s136 = sphi 0, %s135
      %s152 = sphi 0, %s136
      %s160 = sphi 0, %s162
      %s163 = sphi 0, %s160
      %s164 = sphi 0, %s163
      %s180 = sphi 0, %s164
      %s186 = sphi 0, %s188
      %s189 = sphi 0, %s186
      %s190 = sphi 0, %s189
      %s206 = sphi 0, %s190
    $region4: #{gpt_forward.5} parent=1 // loop_header_branch
      %19 = sbr.rel (%p17) target = $region8
    $region5: #{gpt_forward.5} parent=1 // loop_body
      %s21 = ssub.s32 %s16, 1
      %s22 = ssub.s32 %s16, 2
      %s29 = sadd.s32 1, %s24
      %p30 = scmp.ge.s32.totalorder %s29, 1
      %s31 = scalar_select %p30, 0, %s29
      %s32 = sadd.s32 1, %s23
      %s33 = scalar_select %p30, %s32, %s23
      %p34 = scmp.ge.s32.totalorder %s33, 2
      %s35 = scalar_select %p34, 0, %s33
      %s36 = ssub.s32 %s23, %s35
      %p37 = scmp.eq.s32.totalorder %s36, 0
      %s39 = sadd.s32 %s38, 1
      %s40 = scalar_select %p37, %s38, %s39
      %p43 = pneg %p37
      %p44 = scmp.eq.s32.totalorder %s16, 1
      %p45 = por %p43, %p44
      %p46 = scmp.ne.s32.totalorder %s38, %s41
      %p47 = scmp.eq.s32.totalorder %s16, 0
      %p48 = por %p46, %p47
      %p49 = scmp.ne.s32.totalorder %s38, %s41
      %p50 = scmp.eq.s32.totalorder %s21, 1
      %p51 = por %p49, %p50
      %p52 = scmp.ne.s32.totalorder %s41, %s42
      %p53 = scmp.eq.s32.totalorder %s21, 0
      %p54 = por %p52, %p53
      %p55 = scmp.ne.s32.totalorder %s41, %s42
      %p56 = scmp.eq.s32.totalorder %s22, 1
      %p57 = por %p55, %p56
      %p59 = scmp.ne.s32.totalorder %s42, %s58
      %p60 = scmp.eq.s32.totalorder %s22, 0
      %p61 = por %p59, %p60
      %s63 = sadd.s32 %s62, 1
      %p66 = scmp.eq.s32.totalorder %s16, 1
      %p67 = scmp.ne.s32.totalorder %s62, %s64
      %p68 = scmp.eq.s32.totalorder %s16, 0
      %p69 = por %p67, %p68
      %p70 = scmp.ne.s32.totalorder %s62, %s64
      %p71 = scmp.eq.s32.totalorder %s21, 1
      %p72 = por %p70, %p71
      %p73 = scmp.ne.s32.totalorder %s64, %s65
      %p74 = scmp.eq.s32.totalorder %s21, 0
      %p75 = por %p73, %p74
      %p76 = scmp.ne.s32.totalorder %s64, %s65
      %p77 = scmp.eq.s32.totalorder %s22, 1
      %p78 = por %p76, %p77
      %p80 = scmp.ne.s32.totalorder %s65, %s79
      %p81 = scmp.eq.s32.totalorder %s22, 0
      %p82 = por %p80, %p81
      %s84 = sadd.s32 %s83, 1
      %p87 = scmp.eq.s32.totalorder %s16, 1
      %p88 = scmp.ne.s32.totalorder %s83, %s85
      %p89 = scmp.eq.s32.totalorder %s16, 0
      %p90 = por %p88, %p89
      %p91 = scmp.ne.s32.totalorder %s83, %s85
      %p92 = scmp.eq.s32.totalorder %s21, 1
      %p93 = por %p91, %p92
      %p94 = scmp.ne.s32.totalorder %s85, %s86
      %p95 = scmp.eq.s32.totalorder %s21, 0
      %p96 = por %p94, %p95
      %p97 = scmp.ne.s32.totalorder %s85, %s86
      %p98 = scmp.eq.s32.totalorder %s22, 1
      %p99 = por %p97, %p98
      %p101 = scmp.ne.s32.totalorder %s86, %s100
      %p102 = scmp.eq.s32.totalorder %s22, 0
      %p103 = por %p101, %p102
      %s104 = ssub.s32 %s24, %s31
      %p105 = scmp.eq.s32.totalorder %s104, 0
      %s107 = sadd.s32 %s106, 1
      %s108 = scalar_select %p105, %s106, %s107
      %p111 = pneg %p105
      %p112 = scmp.eq.s32.totalorder %s16, 1
      %p113 = por %p111, %p112
      %p114 = scmp.ne.s32.totalorder %s106, %s109
      %p115 = scmp.eq.s32.totalorder %s16, 0
      %p116 = por %p114, %p115
      %p117 = scmp.ne.s32.totalorder %s106, %s109
      %p118 = scmp.eq.s32.totalorder %s21, 1
      %p119 = por %p117, %p118
      %p120 = scmp.ne.s32.totalorder %s109, %s110
      %p121 = scmp.eq.s32.totalorder %s21, 0
      %p122 = por %p120, %p121
      %p123 = scmp.ne.s32.totalorder %s109, %s110
      %p124 = scmp.eq.s32.totalorder %s22, 1
      %p125 = por %p123, %p124
      %p127 = scmp.ne.s32.totalorder %s110, %s126
      %p128 = scmp.eq.s32.totalorder %s22, 0
      %p129 = por %p127, %p128
      %s130 = ssub.s32 %s23, %s35
      %p131 = scmp.eq.s32.totalorder %s130, 0
      %s133 = sadd.s32 %s132, 1
      %s134 = scalar_select %p131, %s132, %s133
      %p137 = pneg %p131
      %p138 = scmp.eq.s32.totalorder %s16, 1
      %p139 = por %p137, %p138
      %p140 = scmp.ne.s32.totalorder %s132, %s135
      %p141 = scmp.eq.s32.totalorder %s16, 0
      %p142 = por %p140, %p141
      %p143 = scmp.ne.s32.totalorder %s132, %s135
      %p144 = scmp.eq.s32.totalorder %s21, 1
      %p145 = por %p143, %p144
      %p146 = scmp.ne.s32.totalorder %s135, %s136
      %p147 = scmp.eq.s32.totalorder %s21, 0
      %p148 = por %p146, %p147
      %p149 = scmp.ne.s32.totalorder %s135, %s136
      %p150 = scmp.eq.s32.totalorder %s22, 1
      %p151 = por %p149, %p150
      %p153 = scmp.ne.s32.totalorder %s136, %s152
      %p154 = scmp.eq.s32.totalorder %s22, 0
      %p155 = por %p153, %p154
      %s156 = ssub.s32 %s23, %s35
      %s157 = ssub.s32 %s24, %s31
      %s158 = sor.u32 %s156, %s157
      %p159 = scmp.eq.s32.totalorder %s158, 0
      %s161 = sadd.s32 %s160, 1
      %s162 = scalar_select %p159, %s160, %s161
      %p165 = pneg %p159
      %p166 = scmp.eq.s32.totalorder %s16, 1
      %p167 = por %p165, %p166
      %p168 = scmp.ne.s32.totalorder %s160, %s163
      %p169 = scmp.eq.s32.totalorder %s16, 0
      %p170 = por %p168, %p169
      %p171 = scmp.ne.s32.totalorder %s160, %s163
      %p172 = scmp.eq.s32.totalorder %s21, 1
      %p173 = por %p171, %p172
      %p174 = scmp.ne.s32.totalorder %s163, %s164
      %p175 = scmp.eq.s32.totalorder %s21, 0
      %p176 = por %p174, %p175
      %p177 = scmp.ne.s32.totalorder %s163, %s164
      %p178 = scmp.eq.s32.totalorder %s22, 1
      %p179 = por %p177, %p178
      %p181 = scmp.ne.s32.totalorder %s164, %s180
      %p182 = scmp.eq.s32.totalorder %s22, 0
      %p183 = por %p181, %p182
      %s184 = ssub.s32 %s23, %s35
      %p185 = scmp.eq.s32.totalorder %s184, 0
      %s187 = sadd.s32 %s186, 1
      %s188 = scalar_select %p185, %s186, %s187
      %p191 = pneg %p185
      %p192 = scmp.eq.s32.totalorder %s16, 1
      %p193 = por %p191, %p192
      %p194 = scmp.ne.s32.totalorder %s186, %s189
      %p195 = scmp.eq.s32.totalorder %s16, 0
      %p196 = por %p194, %p195
      %p197 = scmp.ne.s32.totalorder %s186, %s189
      %p198 = scmp.eq.s32.totalorder %s21, 1
      %p199 = por %p197, %p198
      %p200 = scmp.ne.s32.totalorder %s189, %s190
      %p201 = scmp.eq.s32.totalorder %s21, 0
      %p202 = por %p200, %p201
      %p203 = scmp.ne.s32.totalorder %s189, %s190
      %p204 = scmp.eq.s32.totalorder %s22, 1
      %p205 = por %p203, %p204
      %p207 = scmp.ne.s32.totalorder %s190, %s206
      %p208 = scmp.eq.s32.totalorder %s22, 0
      %p209 = por %p207, %p208
      %p210 = scmp.le.s32.totalorder 1, %s16
      %p211 = scmp.lt.s32.totalorder %s16, 3
      %p212 = pnand %p210, %p211
      %p213 = pneg %p212
      // Predicated region
      $region9: #{gpt_forward.5} parent=5 // pred_check
        _
      $region10: #{gpt_forward.5} parent=5 // pred_check_branch
        %215 = sbr.rel (%p212) target = $region12
      $region11: #{gpt_forward.5} parent=5 // pred_region
        %s216 = ssub.s32 %s16, 1
        // Predicated region
        $region13: #{gpt_forward.5} parent=11 // pred_check
          %p217 = pneg %p75
        $region14: #{gpt_forward.5} parent=11 // pred_check_branch
          %219 = sbr.rel (%p217) target = $region16
        $region15: #{gpt_forward.5} parent=11 // pred_region
          _
        $region16: #{gpt_forward.5} parent=11 // pred_fallthru
          _
        // Predicated region
        $region17: #{gpt_forward.5} parent=11 // pred_check
          %p220 = pneg %p96
        $region18: #{gpt_forward.5} parent=11 // pred_check_branch
          %222 = sbr.rel (%p220) target = $region20
        $region19: #{gpt_forward.5} parent=11 // pred_region
          _
        $region20: #{gpt_forward.5} parent=11 // pred_fallthru
          _
        // Predicated region
        $region21: #{gpt_forward.5} parent=11 // pred_check
          %p223 = pneg %p122
        $region22: #{gpt_forward.5} parent=11 // pred_check_branch
          %225 = sbr.rel (%p223) target = $region24
        $region23: #{gpt_forward.5} parent=11 // pred_region
          %s226 = smul.u32 16, %s26
          %p227 = scmp.lt.s32.totalorder %s226, 15
          %s228 = scalar_select %p227, %s226, 15
          %s229 = smul.addr %s228, 4
          %s230 = scalar_lea.vmem %s3, %s229
          %s231 = smul.u32 16, %s26
        $region24: #{gpt_forward.5} parent=11 // pred_fallthru
          _
      $region12: #{gpt_forward.5} parent=5 // pred_fallthru
        _
      %p232 = scmp.lt.s32.totalorder %s16, 2
      // Predicated region
      $region25: #{gpt_forward.5} parent=5 // pred_check
        %p233 = pneg %p232
      $region26: #{gpt_forward.5} parent=5 // pred_check_branch
        %235 = sbr.rel (%p233) target = $region28
      $region27: #{gpt_forward.5} parent=5 // pred_region
        // Predicated region
        $region29: #{gpt_forward.5} parent=27 // pred_check
          %p236 = pneg %p48
        $region30: #{gpt_forward.5} parent=27 // pred_check_branch
          %238 = sbr.rel (%p236) target = $region32
        $region31: #{gpt_forward.5} parent=27 // pred_region
          %p239 = scmp.lt.s32.totalorder %s23, 1
          %s240 = scalar_select %p239, %s23, 1
          %s241 = smul.addr %s240, 8
          %s242 = scalar_lea.vmem %s0, %s241
        $region32: #{gpt_forward.5} parent=27 // pred_fallthru
          _
        // Predicated region
        $region33: #{gpt_forward.5} parent=27 // pred_check
          %p243 = pneg %p142
        $region34: #{gpt_forward.5} parent=27 // pred_check_branch
          %245 = sbr.rel (%p243) target = $region36
        $region35: #{gpt_forward.5} parent=27 // pred_region
          %p246 = scmp.lt.s32.totalorder %s23, 1
          %s247 = scalar_select %p246, %s23, 1
          %s248 = smul.addr %s247, 8
          %s249 = scalar_lea.vmem %s4, %s248
        $region36: #{gpt_forward.5} parent=27 // pred_fallthru
          _
      $region28: #{gpt_forward.5} parent=5 // pred_fallthru
        _
      %p250 = scmp.le.s32.totalorder 1, %s16
      %p251 = scmp.lt.s32.totalorder %s16, 3
      %p252 = pnand %p250, %p251
      %p253 = pneg %p252
      // Predicated region
      $region37: #{gpt_forward.5} parent=5 // pred_check
        _
      $region38: #{gpt_forward.5} parent=5 // pred_check_branch
        %255 = sbr.rel (%p252) target = $region40
      $region39: #{gpt_forward.5} parent=5 // pred_region
        %s256 = ssub.s32 %s16, 1
        %p257 = scmp.lt.s32.totalorder %s25, 1
        %s258 = scalar_select %p257, %s25, 1
        %s259 = smul.addr %s258, 8
        %s260 = scalar_lea.vmem %s0, %s259
        %p261 = pneg %p54
        %p262 = pneg %p51
        %p263 = pneg %p75
        %p264 = pneg %p72
        %p265 = pneg %p96
        %p266 = pneg %p93
        %s267 = smul.u32 16, %s26
        %p268 = scmp.lt.s32.totalorder %s267, 15
        %s269 = scalar_select %p268, %s267, 15
        %s270 = smul.addr %s269, 4
        %s271 = scalar_lea.vmem %s3, %s270
        %p272 = pneg %p122
        %p273 = pneg %p119
        %p274 = scmp.lt.s32.totalorder %s25, 1
        %s275 = scalar_select %p274, %s25, 1
        %s276 = smul.addr %s275, 8
        %s277 = scalar_lea.vmem %s4, %s276
        %p278 = pneg %p148
        %p279 = pneg %p145
        %p280 = pneg %p176
        %p281 = pneg %p173
        %s282 = sand.u32 %s163, 1
        %s283 = scalar_lea.sflag [#allocation7], %s282
        %s284 = sand.u32 %s163, 1
        %s285 = smul.addr %s284, 4
        %s286 = scalar_lea.vmem [#allocation6], %s285
        %p287 = pneg %p202
        %p288 = pneg %p199
        %p289 = scmp.lt.s32.totalorder %s25, 1
        %s290 = scalar_select %p289, %s25, 1
        %s291 = smul.addr %s290, 8
        %s292 = scalar_lea.vmem %s6, %s291
        %p293 = scmp.lt.s32.totalorder %s25, 1
        %s294 = scalar_select %p293, %s25, 1
        %s295 = smul.addr %s294, 8
        %s296 = scalar_lea.vmem %s0, %s295
        %s297 = smul.u32 16, %s26
        %p298 = scmp.lt.s32.totalorder %s297, 15
        %s299 = scalar_select %p298, %s297, 15
        %s300 = smul.addr %s299, 4
        %s301 = scalar_lea.vmem %s3, %s300
        %s302 = smul.u32 16, %s26
        %p303 = scmp.lt.s32.totalorder %s25, 1
        %s304 = scalar_select %p303, %s25, 1
        %s305 = smul.addr %s304, 8
        %s306 = scalar_lea.vmem %s4, %s305
        %p307 = scmp.lt.s32.totalorder %s25, 1
        %s308 = scalar_select %p307, %s25, 1
        %s309 = smul.addr %s308, 8
        %s310 = scalar_lea.vmem %s6, %s309
        %p312 = scmp.eq.s32.totalorder %s26, 0
        // Predicated region
        $region41: #{gpt_forward.5} parent=39 // pred_check
          %p313 = pneg %p312
        $region42: #{gpt_forward.5} parent=39 // pred_check_branch
          %315 = sbr.rel (%p313) target = $region44
        $region43: #{gpt_forward.5} parent=39 // pred_region
          %v316 = vld [vmem:[%s296] sm:$0xff]
          %v317 = vld [vmem:[%s1] sm:$0x1]
          %v318 = vld [vmem:[%s2] sm:$0x1]
          %vm319 = vcmask 261120
          %v320 = vsel %vm319, %v316, 0.0
          %321 = vadd.xlane.f32.xlu0 %v320
          %v322 = vpop.xlane.xlu0 %321
          %v323 = vrcp.pop 32.0
          %v324 = vmul.f32 %v322, %v323
          %v325 = vsub.f32 %v316, %v324
          %v326 = vmul.f32 %v325, %v325
          %v327 = vsel %vm319, %v326, 0.0
          %328 = vadd.xlane.f32.xlu0 %v327
          %v329 = vpop.xlane.xlu0 %328
          %v330 = vmul.f32 %v329, %v323
          %v331 = vadd.f32 %v330, 1e-05
          %v332 = vrsqrt.pop %v331
          %v333 = vmul.f32 %v325, %v332
          %v335 = vlaneseq
          %v336 = vshrl.u32 %v335, 7
          %v337 = vsub.s32 0, %v336
          %v338 = vrot.slane %v317, %v337
          %v340 = vmul.f32 %v333, %v338
          %v342 = vlaneseq
          %v343 = vshrl.u32 %v342, 7
          %v344 = vsub.s32 0, %v343
          %v345 = vrot.slane %v318, %v344
          %v347 = vadd.f32 %v340, %v345
          %v348 = vpack.c.bf16 %v347, %v347
          %vm349 = vcmask 257024
          %350 = vst.msk [vmem:[#allocation2] sm:$0xf] %vm349, %v348
          %vm351 = vcmask 7168
          %352 = vst.msk [vmem:[#allocation3] sm:$0xff] %vm351, -inf
          %353 = vst.msk [vmem:[#allocation4] sm:$0xff] %vm351, 0.0
          %354 = vst.msk [vmem:[#allocation5] sm:$0xff] %vm351, 0.0
        $region44: #{gpt_forward.5} parent=39 // pred_fallthru
          _
        %v355 = vld [vmem:[#allocation2] sm:$0xf]
        %v356 = vld [vmem:[%s301] sm:$0xf]
        %v357 = vld [vmem:[%s301 + $0x4] sm:$0xf]
        %v358 = vld [vmem:[%s301 + $0x8] sm:$0xf]
        %v359 = vld [vmem:[%s301 + $0xc] sm:$0xf]
        %v360 = vld [vmem:[%s301 + $0x10] sm:$0xf]
        %v361 = vld [vmem:[%s301 + $0x14] sm:$0xf]
        %v362 = vld [vmem:[%s301 + $0x18] sm:$0xf]
        %v363 = vld [vmem:[%s301 + $0x1c] sm:$0xf]
        %v364 = vld [vmem:[%s301 + $0x20] sm:$0xf]
        %v365 = vld [vmem:[%s301 + $0x24] sm:$0xf]
        %v366 = vld [vmem:[%s301 + $0x28] sm:$0xf]
        %v367 = vld [vmem:[%s301 + $0x2c] sm:$0xf]
        %v368 = vld [vmem:[%s301 + $0x30] sm:$0xf]
        %v369 = vld [vmem:[%s301 + $0x34] sm:$0xf]
        %v370 = vld [vmem:[%s301 + $0x38] sm:$0xf]
        %v371 = vld [vmem:[%s301 + $0x3c] sm:$0xf]
        %v388 = vunpack.c.l.b16 %v356
        %v389 = vunpack.c.l.b16 %v357
        %v390 = vunpack.c.l.b16 %v358
        %v391 = vunpack.c.l.b16 %v359
        %v392 = vunpack.c.l.b16 %v360
        %v393 = vunpack.c.l.b16 %v361
        %v394 = vunpack.c.l.b16 %v362
        %v395 = vunpack.c.l.b16 %v363
        %v396 = vunpack.c.l.b16 %v364
        %v397 = vunpack.c.l.b16 %v365
        %v398 = vunpack.c.l.b16 %v366
        %v399 = vunpack.c.l.b16 %v367
        %v400 = vunpack.c.l.b16 %v368
        %v401 = vunpack.c.l.b16 %v369
        %v402 = vunpack.c.l.b16 %v370
        %v403 = vunpack.c.l.b16 %v371
        %v404 = vpack.c.b16 %v389, %v388
        %v405 = vpack.c.b16 %v391, %v390
        %v406 = vpack.c.b16 %v393, %v392
        %v407 = vpack.c.b16 %v395, %v394
        %v408 = vpack.c.b16 %v397, %v396
        %v409 = vpack.c.b16 %v399, %v398
        %v410 = vpack.c.b16 %v401, %v400
        %v411 = vpack.c.b16 %v403, %v402
        %vm412 = vcmask 261120
        %v414 = vsel %vm412, %v355, 0
        %v417 = vsel %vm412, %v404, 0
        %v420 = vsel %vm412, %v405, 0
        %v423 = vsel %vm412, %v406, 0
        %v426 = vsel %vm412, %v407, 0
        %v429 = vsel %vm412, %v408, 0
        %v432 = vsel %vm412, %v409, 0
        %v435 = vsel %vm412, %v410, 0
        %v438 = vsel %vm412, %v411, 0
        %440 = vmatprep.subr.bf16.mxu0 0
        %441 = vmatpush1.bf16.xpose.msra.mxu0 %v417
        %442 = vmatprep.subr.bf16.mxu0 0
        %443 = vmatpush1.bf16.xpose.msra.mxu0 %v420
        %444 = vmatprep.subr.bf16.mxu0 0
        %445 = vmatpush1.bf16.xpose.msra.mxu0 %v423
        %446 = vmatprep.subr.bf16.mxu0 0
        %447 = vmatpush1.bf16.xpose.msra.mxu0 %v426
        %448 = vmatprep.subr.bf16.mxu0 0
        %449 = vmatpush1.bf16.xpose.msra.mxu0 %v429
        %450 = vmatprep.subr.bf16.mxu0 0
        %451 = vmatpush1.bf16.xpose.msra.mxu0 %v432
        %452 = vmatprep.subr.bf16.mxu0 0
        %453 = vmatpush1.bf16.xpose.msra.mxu0 %v435
        %454 = vmatprep.subr.bf16.mxu0 0
        %455 = vmatpush1.bf16.xpose.msra.mxu0 %v438
        %456 = vmatprep.subr.bf16.mxu0 0
        %457 = vmatpush1.bf16.xpose.msra.mxu0 0
        %458 = vmatprep.subr.bf16.mxu0 0
        %459 = vmatpush1.bf16.xpose.msra.mxu0 0
        %460 = vmatprep.subr.bf16.mxu0 0
        %461 = vmatpush1.bf16.xpose.msra.mxu0 0
        %462 = vmatprep.subr.bf16.mxu0 0
        %463 = vmatpush1.bf16.xpose.msra.mxu0 0
        %464 = vmatprep.subr.bf16.mxu0 0
        %465 = vmatpush1.bf16.xpose.msra.mxu0 0
        %466 = vmatprep.subr.bf16.mxu0 0
        %467 = vmatpush1.bf16.xpose.msra.mxu0 0
        %468 = vmatprep.subr.bf16.mxu0 0
        %469 = vmatpush1.bf16.xpose.msra.mxu0 0
        %470 = vmatprep.subr.bf16.mxu0 0
        %471 = vmatpush1.bf16.xpose.msra.mxu0 0
        %472 = vmatprep.mubr.bf16.mxu0 0
        %473 = vmatmul.mubr.bf16.gmra.mrb[0].mxu0 %v414
        %v474 = vpop.f32.mrb[0].mxu0
        %v475 = vadd.f32 0.0, %v474
        %v476 = vpop.f32.mrb[0].mxu0
        %v477 = vpop.f32.mrb[0].mxu0
        %v478 = vpop.f32.mrb[0].mxu0
        %479 = vdwg.mxu0
        %v480 = vpack.c.bf16 %v475, %v475
        %481 = vst [vmem:[%s286] sm:$0xf] %v480
        %v482 = vld [vmem:[%s306] sm:$0xff]
        %v483 = vlaneseq
        %v484 = vand.u32 %v483, 127
        %s485 = smul.u32 %s26, 128
        %v486 = vstv %s485
        %v487 = vadd.s32 %v484, %v486
        %v488 = vld [vmem:[#allocation5] sm:$0xff]
        %489 = vset.pattern.permute.xlu0 0
        %490 = vperm.xlu0 %489, %v482
        %v491 = vpop.permute.xlu0 %490
        %vm492 = vcmp.eq.s32.totalorder %v487, %v491
        %v493 = vsel %vm492, %v475, 0.0
        %494 = vadd.xlane.f32.xlu0 %v493
        %v495 = vpop.xlane.xlu0 %494
        %v496 = vadd.f32 %v488, %v495
        %vm497 = vcmask 7168
        %498 = vst.msk [vmem:[#allocation5] sm:$0xff] %vm497, %v496
        %v499 = vld [vmem:[#allocation3] sm:$0xff]
        %500 = vmax.xlane.f32.xlu0 %v475
        %v501 = vpop.xlane.xlu0 %500
        %v502 = vmax.f32 %v499, %v501
        %v503 = vld [vmem:[#allocation4] sm:$0xff]
        %v504 = vsub.f32 %v499, %v502
        %v505 = vmul.f32 %v504, 1.442695
        %v506 = vpow.pop %v505
        %v507 = vmul.f32 %v503, %v506
        %509 = vset.pattern.permute.xlu0 0
        %510 = vperm.xlu0 %509, %v502
        %v511 = vpop.permute.xlu0 %510
        %v513 = vsub.f32 %v475, %v511
        %v514 = vmul.f32 %v513, 1.442695
        %v515 = vpow.pop %v514
        %516 = vadd.xlane.f32.xlu0 %v515
        %v517 = vpop.xlane.xlu0 %516
        %v518 = vadd.f32 %v507, %v517
        %519 = vst.msk [vmem:[#allocation4] sm:$0xff] %vm497, %v518
        %520 = vst.msk [vmem:[#allocation3] sm:$0xff] %vm497, %v502
        // Predicated region
        $region45: #{gpt_forward.5} parent=39 // pred_check
          %p521 = pneg %p312
        $region46: #{gpt_forward.5} parent=39 // pred_check_branch
          %523 = sbr.rel (%p521) target = $region48
        $region47: #{gpt_forward.5} parent=39 // pred_region
          %vm524 = vcmp.ne.s32.totalorder %v482, 4294967196
          %v525 = vsel %vm524, 1, 0
          %v526 = vcvt.s32.f32 %v525
          %v527 = vld [vmem:[#allocation3] sm:$0xff]
          %v528 = vld [vmem:[#allocation4] sm:$0xff]
          %v529 = vlog2.pop %v528
          %v530 = vmul.f32 %v529, 0.6931472
          %v531 = vadd.f32 %v527, %v530
          %v532 = vld [vmem:[#allocation5] sm:$0xff]
          %v533 = vsub.f32 %v531, %v532
          %v534 = vmul.f32 %v533, %v526
          %535 = vst.msk [vmem:[%s310] sm:$0xff] %vm497, %v534
        $region48: #{gpt_forward.5} parent=39 // pred_fallthru
          _
        %s536 = sand.u32 %s163, 1
        %s537 = scalar_lea.sflag [#allocation7], %s536
        %s538 = sand.u32 %s163, 1
        %s539 = smul.addr %s538, 4
        %s540 = scalar_lea.vmem [#allocation6], %s539
        %p541 = scmp.lt.s32.totalorder %s25, 1
        %s542 = scalar_select %p541, %s25, 1
        %s543 = smul.addr %s542, 8
        %s544 = scalar_lea.vmem %s6, %s543
        // Predicated region
        $region49: #{gpt_forward.5} parent=39 // pred_check
          %p545 = pneg %p173
        $region50: #{gpt_forward.5} parent=39 // pred_check_branch
          %547 = sbr.rel (%p545) target = $region52
        $region51: #{gpt_forward.5} parent=39 // pred_region
          %s549 = ssub.s32 64, 64
          %550 = vsyncadd %s537, %s549
          %s551 = sadd.s32 %s26, %s25
          %s552 = smul.addr %s551, 64
          %s553 = scalar_lea.hbm %s5, %s552
          %s555 = sshll.u32 %s540, 4
          %s556 = int_to_ptr.vmem [resolvable:$true] %s555
          %558 = dma.vmem_to_hbm [thread:$0]  %s556, 64, %s553, %s537
        $region52: #{gpt_forward.5} parent=39 // pred_fallthru
          _
        // Predicated region
        $region53: #{gpt_forward.5} parent=39 // pred_check
          %p559 = pneg %p199
        $region54: #{gpt_forward.5} parent=39 // pred_check_branch
          %561 = sbr.rel (%p559) target = $region56
        $region55: #{gpt_forward.5} parent=39 // pred_region
          _
        $region56: #{gpt_forward.5} parent=39 // pred_fallthru
          _
      $region40: #{gpt_forward.5} parent=5 // pred_fallthru
        _
      %p562 = scmp.le.s32.totalorder 2, %s16
      // Predicated region
      $region57: #{gpt_forward.5} parent=5 // pred_check
        %p563 = pneg %p562
      $region58: #{gpt_forward.5} parent=5 // pred_check_branch
        %565 = sbr.rel (%p563) target = $region60
      $region59: #{gpt_forward.5} parent=5 // pred_region
        %s566 = ssub.s32 %s16, 2
        // Predicated region
        $region61: #{gpt_forward.5} parent=59 // pred_check
          %p567 = pneg %p179
        $region62: #{gpt_forward.5} parent=59 // pred_check_branch
          %569 = sbr.rel (%p567) target = $region64
        $region63: #{gpt_forward.5} parent=59 // pred_region
          %s570 = sand.u32 %s164, 1
          %s571 = scalar_lea.sflag [#allocation7], %s570
          %s572 = sand.u32 %s164, 1
          %s573 = smul.addr %s572, 4
          %s574 = scalar_lea.vmem [#allocation6], %s573
          %575 = dma.done %s571, 64
        $region64: #{gpt_forward.5} parent=59 // pred_fallthru
          _
        // Predicated region
        $region65: #{gpt_forward.5} parent=59 // pred_check
          %p576 = pneg %p205
        $region66: #{gpt_forward.5} parent=59 // pred_check_branch
          %578 = sbr.rel (%p576) target = $region68
        $region67: #{gpt_forward.5} parent=59 // pred_region
          %p579 = scmp.lt.s32.totalorder %s27, 1
          %s580 = scalar_select %p579, %s27, 1
          %s581 = smul.addr %s580, 8
          %s582 = scalar_lea.vmem %s6, %s581
        $region68: #{gpt_forward.5} parent=59 // pred_fallthru
          _
      $region60: #{gpt_forward.5} parent=5 // pred_fallthru
        _
    $region6: #{gpt_forward.5} parent=1 // loop_footer
      %s20 = sadd.s32 1, %s16
    $region7: #{gpt_forward.5} parent=1 // loop_footer_branch
      %15 = sbr.rel target = $region3
    $region8: #{gpt_forward.5} parent=1 // loop_exit
      _
    %583 = vsyncpa [#allocation7], 1
    %s584 = scalar_lea.sflag [#allocation7], 1
    %585 = vsyncpa %s584, 1

// kernel: gpt_forward.3
$region0: #{gpt_forward.3}
  #allocation0 [shape = 'u32[]', space=smem, size = 0x4, offset = 0x4, fixed_abs, tag = 'smem constant byte address 0x4 - core index']
  #allocation1 [shape = 'u32[144,128]{1,0:T(1,128)}', space=vmem, size = 0x12000, scoped, tag = 'internal scratch']
  %s0 = inlined_call_operand.vmem [shape: f32[16,32], index: 0, kind: input, shape index: {}]
  %s1 = inlined_call_operand.vmem [shape: f32[2,1,8], index: 1, kind: input, shape index: {}]
  %s2 = inlined_call_operand.vmem [shape: f32[1,32], index: 2, kind: input, shape index: {}]
  %s3 = inlined_call_operand.vmem [shape: f32[1,32], index: 3, kind: input, shape index: {}]
  %s4 = inlined_call_operand.vmem [shape: bf16[32,96], index: 4, kind: input, shape index: {}]
  %s5 = inlined_call_operand.vmem [shape: f32[1,96], index: 5, kind: input, shape index: {}]
  %s6 = inlined_call_operand.vmem [shape: bf16[32,32], index: 6, kind: input, shape index: {}]
  %s7 = inlined_call_operand.vmem [shape: f32[1,32], index: 7, kind: input, shape index: {}]
  %s8 = inlined_call_operand.vmem [shape: f32[1,32], index: 8, kind: input, shape index: {}]
  %s9 = inlined_call_operand.vmem [shape: f32[1,32], index: 9, kind: input, shape index: {}]
  %s10 = inlined_call_operand.vmem [shape: bf16[32,128], index: 10, kind: input, shape index: {}]
  %s11 = inlined_call_operand.vmem [shape: f32[1,128], index: 11, kind: input, shape index: {}]
  %s12 = inlined_call_operand.vmem [shape: bf16[128,32], index: 12, kind: input, shape index: {}]
  %s13 = inlined_call_operand.vmem [shape: f32[1,32], index: 13, kind: input, shape index: {}]
  %s14 = inlined_call_operand.vmem [shape: f32[16,32], index: 14, kind: output, shape index: {}]
  %s15 = sld [smem:[#allocation0]]
  $region66: #{gpt_forward.3} parent=0
    _
  %s17 = ssub.s32 1, %s15
  %s18 = scalar_select 0, %s17, %s15
  // Predicated region
  $region2: #{gpt_forward.3} parent=0 // pred_check
    _
  $region3: #{gpt_forward.3} parent=0 // pred_check_branch
    %20 = sbr.rel (0) target = $region5
  $region4: #{gpt_forward.3} parent=0 // pred_region
    _
  $region5: #{gpt_forward.3} parent=0 // pred_fallthru
    _
  // Predicated region
  $region6: #{gpt_forward.3} parent=0 // pred_check
    _
  $region7: #{gpt_forward.3} parent=0 // pred_check_branch
    %22 = sbr.rel (0) target = $region9
  $region8: #{gpt_forward.3} parent=0 // pred_region
    _
  $region9: #{gpt_forward.3} parent=0 // pred_fallthru
    _
  // Predicated region
  $region10: #{gpt_forward.3} parent=0 // pred_check
    _
  $region11: #{gpt_forward.3} parent=0 // pred_check_branch
    %24 = sbr.rel (0) target = $region13
  $region12: #{gpt_forward.3} parent=0 // pred_region
    _
  $region13: #{gpt_forward.3} parent=0 // pred_fallthru
    _
  // Predicated region
  $region14: #{gpt_forward.3} parent=0 // pred_check
    _
  $region15: #{gpt_forward.3} parent=0 // pred_check_branch
    %26 = sbr.rel (0) target = $region17
  $region16: #{gpt_forward.3} parent=0 // pred_region
    _
  $region17: #{gpt_forward.3} parent=0 // pred_fallthru
    _
  // Predicated region
  $region18: #{gpt_forward.3} parent=0 // pred_check
    _
  $region19: #{gpt_forward.3} parent=0 // pred_check_branch
    %28 = sbr.rel (0) target = $region21
  $region20: #{gpt_forward.3} parent=0 // pred_region
    _
  $region21: #{gpt_forward.3} parent=0 // pred_fallthru
    _
  // Predicated region
  $region22: #{gpt_forward.3} parent=0 // pred_check
    _
  $region23: #{gpt_forward.3} parent=0 // pred_check_branch
    %30 = sbr.rel (0) target = $region25
  $region24: #{gpt_forward.3} parent=0 // pred_region
    _
  $region25: #{gpt_forward.3} parent=0 // pred_fallthru
    _
  // Predicated region
  $region26: #{gpt_forward.3} parent=0 // pred_check
    _
  $region27: #{gpt_forward.3} parent=0 // pred_check_branch
    %32 = sbr.rel (0) target = $region29
  $region28: #{gpt_forward.3} parent=0 // pred_region
    _
  $region29: #{gpt_forward.3} parent=0 // pred_fallthru
    _
  // Predicated region
  $region30: #{gpt_forward.3} parent=0 // pred_check
    _
  $region31: #{gpt_forward.3} parent=0 // pred_check_branch
    %34 = sbr.rel (0) target = $region33
  $region32: #{gpt_forward.3} parent=0 // pred_region
    _
  $region33: #{gpt_forward.3} parent=0 // pred_fallthru
    _
  // Predicated region
  $region34: #{gpt_forward.3} parent=0 // pred_check
    _
  $region35: #{gpt_forward.3} parent=0 // pred_check_branch
    %36 = sbr.rel (0) target = $region37
  $region36: #{gpt_forward.3} parent=0 // pred_region
    _
  $region37: #{gpt_forward.3} parent=0 // pred_fallthru
    _
  // Predicated region
  $region38: #{gpt_forward.3} parent=0 // pred_check
    _
  $region39: #{gpt_forward.3} parent=0 // pred_check_branch
    %38 = sbr.rel (0) target = $region41
  $region40: #{gpt_forward.3} parent=0 // pred_region
    _
  $region41: #{gpt_forward.3} parent=0 // pred_fallthru
    _
  // Predicated region
  $region42: #{gpt_forward.3} parent=0 // pred_check
    _
  $region43: #{gpt_forward.3} parent=0 // pred_check_branch
    %40 = sbr.rel (0) target = $region45
  $region44: #{gpt_forward.3} parent=0 // pred_region
    _
  $region45: #{gpt_forward.3} parent=0 // pred_fallthru
    _
  // Predicated region
  $region46: #{gpt_forward.3} parent=0 // pred_check
    _
  $region47: #{gpt_forward.3} parent=0 // pred_check_branch
    %42 = sbr.rel (0) target = $region49
  $region48: #{gpt_forward.3} parent=0 // pred_region
    _
  $region49: #{gpt_forward.3} parent=0 // pred_fallthru
    _
  // Predicated region
  $region50: #{gpt_forward.3} parent=0 // pred_check
    _
  $region51: #{gpt_forward.3} parent=0 // pred_check_branch
    %44 = sbr.rel (0) target = $region53
  $region52: #{gpt_forward.3} parent=0 // pred_region
    _
  $region53: #{gpt_forward.3} parent=0 // pred_fallthru
    _
  // Predicated region
  $region54: #{gpt_forward.3} parent=0 // pred_check
    _
  $region55: #{gpt_forward.3} parent=0 // pred_check_branch
    %46 = sbr.rel (0) target = $region57
  $region56: #{gpt_forward.3} parent=0 // pred_region
    _
  $region57: #{gpt_forward.3} parent=0 // pred_fallthru
    _
  %v48 = vld [vmem:[%s0] sm:$0xff]
  %v49 = vld [vmem:[%s0 + $0x8] sm:$0xff]
  %v50 = vld [vmem:[%s2] sm:$0x1]
  %v51 = vld [vmem:[%s3] sm:$0x1]
  %vm52 = vcmask 261120
  %v53 = vsel %vm52, %v48, 0.0
  %54 = vadd.xlane.f32.xlu0 %v53
  %v55 = vpop.xlane.xlu0 %54
  %v56 = vsel %vm52, %v49, 0.0
  %57 = vadd.xlane.f32.xlu0 %v56
  %v58 = vpop.xlane.xlu0 %57
  %v59 = vrcp.pop 32.0
  %v60 = vmul.f32 %v55, %v59
  %v61 = vmul.f32 %v58, %v59
  %v62 = vsub.f32 %v48, %v60
  %v63 = vsub.f32 %v49, %v61
  %v64 = vmul.f32 %v62, %v62
  %v65 = vmul.f32 %v63, %v63
  %v66 = vsel %vm52, %v64, 0.0
  %67 = vadd.xlane.f32.xlu0 %v66
  %v68 = vpop.xlane.xlu0 %67
  %v69 = vsel %vm52, %v65, 0.0
  %70 = vadd.xlane.f32.xlu0 %v69
  %v71 = vpop.xlane.xlu0 %70
  %v72 = vmul.f32 %v68, %v59
  %v73 = vmul.f32 %v71, %v59
  %v74 = vadd.f32 %v72, 1e-05
  %v75 = vadd.f32 %v73, 1e-05
  %v76 = vrsqrt.pop %v74
  %v77 = vrsqrt.pop %v75
  %v78 = vmul.f32 %v62, %v76
  %v79 = vmul.f32 %v63, %v77
  %v81 = vlaneseq
  %v82 = vshrl.u32 %v81, 7
  %v83 = vsub.s32 0, %v82
  %v84 = vrot.slane %v50, %v83
  %v86 = vmul.f32 %v78, %v84
  %v87 = vmul.f32 %v79, %v84
  %v89 = vlaneseq
  %v90 = vshrl.u32 %v89, 7
  %v91 = vsub.s32 0, %v90
  %v92 = vrot.slane %v51, %v91
  %v94 = vadd.f32 %v86, %v92
  %v95 = vadd.f32 %v87, %v92
  %v96 = vpack.c.bf16 %v95, %v94
  %v97 = vld [vmem:[%s4] sm:$0xf]
  %v98 = vld [vmem:[%s4 + $0x4] sm:$0xf]
  %v99 = vld [vmem:[%s4 + $0x8] sm:$0xf]
  %v100 = vld [vmem:[%s4 + $0xc] sm:$0xf]
  %v101 = vld [vmem:[%s5] sm:$0x1]
  %v103 = vlaneseq
  %v104 = vshrl.u32 %v103, 7
  %v105 = vsub.s32 0, %v104
  %v106 = vrot.slane %v101, %v105
  %v112 = vunpack.c.l.b16 %v97
  %v113 = vunpack.c.l.b16 %v98
  %v114 = vunpack.c.l.b16 %v99
  %v115 = vunpack.c.l.b16 %v100
  %v116 = vpack.c.b16 %v113, %v112
  %v117 = vpack.c.b16 %v115, %v114
  %v121 = vsel %vm52, %v96, 0
  %123 = vmatprep.subr.bf16.mxu0 0
  %124 = vmatpush1.bf16.msra.mxu0 %v116
  %125 = vmatprep.subr.bf16.mxu0 0
  %126 = vmatpush1.bf16.msra.mxu0 %v117
  %127 = vmatprep.subr.bf16.mxu0 0
  %128 = vmatpush1.bf16.msra.mxu0 0
  %129 = vmatprep.subr.bf16.mxu0 0
  %130 = vmatpush1.bf16.msra.mxu0 0
  %131 = vmatprep.subr.bf16.mxu0 0
  %132 = vmatpush1.bf16.msra.mxu0 0
  %133 = vmatprep.subr.bf16.mxu0 0
  %134 = vmatpush1.bf16.msra.mxu0 0
  %135 = vmatprep.subr.bf16.mxu0 0
  %136 = vmatpush1.bf16.msra.mxu0 0
  %137 = vmatprep.subr.bf16.mxu0 0
  %138 = vmatpush1.bf16.msra.mxu0 0
  %139 = vmatprep.subr.bf16.mxu0 0
  %140 = vmatpush1.bf16.msra.mxu0 0
  %141 = vmatprep.subr.bf16.mxu0 0
  %142 = vmatpush1.bf16.msra.mxu0 0
  %143 = vmatprep.subr.bf16.mxu0 0
  %144 = vmatpush1.bf16.msra.mxu0 0
  %145 = vmatprep.subr.bf16.mxu0 0
  %146 = vmatpush1.bf16.msra.mxu0 0
  %147 = vmatprep.subr.bf16.mxu0 0
  %148 = vmatpush1.bf16.msra.mxu0 0
  %149 = vmatprep.subr.bf16.mxu0 0
  %150 = vmatpush1.bf16.msra.mxu0 0
  %151 = vmatprep.subr.bf16.mxu0 0
  %152 = vmatpush1.bf16.msra.mxu0 0
  %153 = vmatprep.subr.bf16.mxu0 0
  %154 = vmatpush1.bf16.msra.mxu0 0
  %155 = vmatprep.mubr.bf16.mxu0 0
  %156 = vmatmul.mubr.bf16.gmra.mrb[0].mxu0 %v121
  %v157 = vpop.f32.mrb[0].mxu0
  %v158 = vadd.f32 %v106, %v157
  %v159 = vpop.f32.mrb[0].mxu0
  %v160 = vpop.f32.mrb[0].mxu0
  %v161 = vadd.f32 %v106, %v160
  %v162 = vpop.f32.mrb[0].mxu0
  %163 = vdwg.mxu0
  %v164 = vlaneseq
  %v165 = vshrl.u32 %v164, 7
  %v166 = vlaneseq
  %v167 = vand.u32 %v166, 127
  %vm168 = vcmp.ge.s32.totalorder %v165, %v167
  %v169 = vld [vmem:[%s1] sm:$0x1]
  %vm170 = vcmp.gt.f32.partialorder %v169, 0.0
  %v171 = vsel %vm170, 1, 0
  %v172 = vlaneseq
  %v173 = vshrl.u32 %v172, 7
  %v174 = vsub.s32 0, %v173
  %v175 = vrot.slane %v171, %v174
  %vm176 = vcmp.eq.s32.totalorder %v175, 1
  %vm177 = vmand %vm168, %vm176
  %v178 = vsel %vm177, 0.0, -1e+09
  %v179 = vpack.c.bf16 %v158, %v158
  %181 = vrot.lane.b32.xlu0 %v179, 96
  %v182 = vpop.permute.xlu0 %181
  %vm183 = vcmask 130048
  %v185 = vsel %vm183, %v179, 0
  %v188 = vsel %vm183, %v182, 0
  %190 = vmatprep.subr.bf16.mxu0 0
  %191 = vmatpush1.bf16.xpose.msra.mxu0 %v188
  %192 = vmatprep.subr.bf16.mxu0 0
  %193 = vmatpush1.bf16.xpose.msra.mxu0 0
  %194 = vmatprep.subr.bf16.mxu0 0
  %195 = vmatpush1.bf16.xpose.msra.mxu0 0
  %196 = vmatprep.subr.bf16.mxu0 0
  %197 = vmatpush1.bf16.xpose.msra.mxu0 0
  %198 = vmatprep.subr.bf16.mxu0 0
  %199 = vmatpush1.bf16.xpose.msra.mxu0 0
  %200 = vmatprep.subr.bf16.mxu0 0
  %201 = vmatpush1.bf16.xpose.msra.mxu0 0
  %202 = vmatprep.subr.bf16.mxu0 0
  %203 = vmatpush1.bf16.xpose.msra.mxu0 0
  %204 = vmatprep.subr.bf16.mxu0 0
  %205 = vmatpush1.bf16.xpose.msra.mxu0 0
  %206 = vmatprep.subr.bf16.mxu0 0
  %207 = vmatpush1.bf16.xpose.msra.mxu0 0
  %208 = vmatprep.subr.bf16.mxu0 0
  %209 = vmatpush1.bf16.xpose.msra.mxu0 0
  %210 = vmatprep.subr.bf16.mxu0 0
  %211 = vmatpush1.bf16.xpose.msra.mxu0 0
  %212 = vmatprep.subr.bf16.mxu0 0
  %213 = vmatpush1.bf16.xpose.msra.mxu0 0
  %214 = vmatprep.subr.bf16.mxu0 0
  %215 = vmatpush1.bf16.xpose.msra.mxu0 0
  %216 = vmatprep.subr.bf16.mxu0 0
  %217 = vmatpush1.bf16.xpose.msra.mxu0 0
  %218 = vmatprep.subr.bf16.mxu0 0
  %219 = vmatpush1.bf16.xpose.msra.mxu0 0
  %220 = vmatprep.subr.bf16.mxu0 0
  %221 = vmatpush1.bf16.xpose.msra.mxu0 0
  %222 = vmatprep.mubr.bf16.mxu0 0
  %223 = vmatmul.mubr.bf16.gmra.mrb[0].mxu0 %v185
  %v224 = vpop.f32.mrb[0].mxu0
  %v225 = vadd.f32 0.0, %v224
  %v226 = vpop.f32.mrb[0].mxu0
  %v227 = vpop.f32.mrb[0].mxu0
  %v228 = vpop.f32.mrb[0].mxu0
  %229 = vdwg.mxu0
  %v230 = vmul.f32 %v225, 0.25
  %v231 = vadd.f32 %v230, %v178
  %vm232 = vcmask 64512
  %v233 = vsel %vm232, %v231, -inf
  %234 = vmax.xlane.f32.xlu0 %v233
  %v235 = vpop.xlane.xlu0 %234
  %v236 = vsub.f32 %v231, %v235
  %v237 = vmul.f32 %v236, 1.442695
  %v238 = vpow.pop %v237
  %v239 = vsel %vm232, %v238, 0.0
  %240 = vadd.xlane.f32.xlu0 %v239
  %v241 = vpop.xlane.xlu0 %240
  %v242 = vrcp.pop %v241
  %v243 = vmul.f32 %v238, %v242
  %v244 = vpack.c.bf16 %v243, %v243
  %245 = vrot.lane.b32.xlu0 %v179, 64
  %v246 = vpop.permute.xlu0 %245
  %v248 = vsel %vm232, %v244, 0
  %vm250 = vcmask 1043456
  %v252 = vsel %vm250, %v246, 0
  %254 = vmatprep.subr.bf16.mxu0 0
  %255 = vmatpush1.bf16.msra.mxu0 %v252
  %256 = vmatprep.subr.bf16.mxu0 0
  %257 = vmatpush1.bf16.msra.mxu0 0
  %258 = vmatprep.subr.bf16.mxu0 0
  %259 = vmatpush1.bf16.msra.mxu0 0
  %260 = vmatprep.subr.bf16.mxu0 0
  %261 = vmatpush1.bf16.msra.mxu0 0
  %262 = vmatprep.subr.bf16.mxu0 0
  %263 = vmatpush1.bf16.msra.mxu0 0
  %264 = vmatprep.subr.bf16.mxu0 0
  %265 = vmatpush1.bf16.msra.mxu0 0
  %266 = vmatprep.subr.bf16.mxu0 0
  %267 = vmatpush1.bf16.msra.mxu0 0
  %268 = vmatprep.subr.bf16.mxu0 0
  %269 = vmatpush1.bf16.msra.mxu0 0
  %270 = vmatprep.subr.bf16.mxu0 0
  %271 = vmatpush1.bf16.msra.mxu0 0
  %272 = vmatprep.subr.bf16.mxu0 0
  %273 = vmatpush1.bf16.msra.mxu0 0
  %274 = vmatprep.subr.bf16.mxu0 0
  %275 = vmatpush1.bf16.msra.mxu0 0
  %276 = vmatprep.subr.bf16.mxu0 0
  %277 = vmatpush1.bf16.msra.mxu0 0
  %278 = vmatprep.subr.bf16.mxu0 0
  %279 = vmatpush1.bf16.msra.mxu0 0
  %280 = vmatprep.subr.bf16.mxu0 0
  %281 = vmatpush1.bf16.msra.mxu0 0
  %282 = vmatprep.subr.bf16.mxu0 0
  %283 = vmatpush1.bf16.msra.mxu0 0
  %284 = vmatprep.subr.bf16.mxu0 0
  %285 = vmatpush1.bf16.msra.mxu0 0
  %286 = vmatprep.mubr.bf16.mxu0 0
  %287 = vmatmul.mubr.bf16.gmra.mrb[0].mxu0 %v248
  %v288 = vpop.f32.mrb[0].mxu0
  %v289 = vadd.f32 0.0, %v288
  %v290 = vpop.f32.mrb[0].mxu0
  %v291 = vpop.f32.mrb[0].mxu0
  %v292 = vpop.f32.mrb[0].mxu0
  %293 = vdwg.mxu0
  %294 = vrot.lane.b32.xlu0 %v179, 112
  %v295 = vpop.permute.xlu0 %294
  %296 = vrot.lane.b32.xlu0 %v179, 80
  %v297 = vpop.permute.xlu0 %296
  %v299 = vsel %vm183, %v295, 0
  %v302 = vsel %vm183, %v297, 0
  %304 = vmatprep.subr.bf16.mxu0 0
  %305 = vmatpush1.bf16.xpose.msra.mxu0 %v302
  %306 = vmatprep.subr.bf16.mxu0 0
  %307 = vmatpush1.bf16.xpose.msra.mxu0 0
  %308 = vmatprep.subr.bf16.mxu0 0
  %309 = vmatpush1.bf16.xpose.msra.mxu0 0
  %310 = vmatprep.subr.bf16.mxu0 0
  %311 = vmatpush1.bf16.xpose.msra.mxu0 0
  %312 = vmatprep.subr.bf16.mxu0 0
  %313 = vmatpush1.bf16.xpose.msra.mxu0 0
  %314 = vmatprep.subr.bf16.mxu0 0
  %315 = vmatpush1.bf16.xpose.msra.mxu0 0
  %316 = vmatprep.subr.bf16.mxu0 0
  %317 = vmatpush1.bf16.xpose.msra.mxu0 0
  %318 = vmatprep.subr.bf16.mxu0 0
  %319 = vmatpush1.bf16.xpose.msra.mxu0 0
  %320 = vmatprep.subr.bf16.mxu0 0
  %321 = vmatpush1.bf16.xpose.msra.mxu0 0
  %322 = vmatprep.subr.bf16.mxu0 0
  %323 = vmatpush1.bf16.xpose.msra.mxu0 0
  %324 = vmatprep.subr.bf16.mxu0 0
  %325 = vmatpush1.bf16.xpose.msra.mxu0 0
  %326 = vmatprep.subr.bf16.mxu0 0
  %327 = vmatpush1.bf16.xpose.msra.mxu0 0
  %328 = vmatprep.subr.bf16.mxu0 0
  %329 = vmatpush1.bf16.xpose.msra.mxu0 0
  %330 = vmatprep.subr.bf16.mxu0 0
  %331 = vmatpush1.bf16.xpose.msra.mxu0 0
  %332 = vmatprep.subr.bf16.mxu0 0
  %333 = vmatpush1.bf16.xpose.msra.mxu0 0
  %334 = vmatprep.subr.bf16.mxu0 0
  %335 = vmatpush1.bf16.xpose.msra.mxu0 0
  %336 = vmatprep.mubr.bf16.mxu0 0
  %337 = vmatmul.mubr.bf16.gmra.mrb[0].mxu0 %v299
  %v338 = vpop.f32.mrb[0].mxu0
  %v339 = vadd.f32 0.0, %v338
  %v340 = vpop.f32.mrb[0].mxu0
  %v341 = vpop.f32.mrb[0].mxu0
  %v342 = vpop.f32.mrb[0].mxu0
  %343 = vdwg.mxu0
  %v344 = vmul.f32 %v339, 0.25
  %v345 = vadd.f32 %v344, %v178
  %v346 = vsel %vm232, %v345, -inf
  %347 = vmax.xlane.f32.xlu0 %v346
  %v348 = vpop.xlane.xlu0 %347
  %v349 = vsub.f32 %v345, %v348
  %v350 = vmul.f32 %v349, 1.442695
  %v351 = vpow.pop %v350
  %v352 = vsel %vm232, %v351, 0.0
  %353 = vadd.xlane.f32.xlu0 %v352
  %v354 = vpop.xlane.xlu0 %353
  %v355 = vrcp.pop %v354
  %v356 = vmul.f32 %v351, %v355
  %v357 = vpack.c.bf16 %v356, %v356
  %358 = vrot.lane.b32.xlu0 %v179, 48
  %v359 = vpop.permute.xlu0 %358
  %v361 = vsel %vm232, %v357, 0
  %v364 = vsel %vm250, %v359, 0
  %366 = vmatprep.subr.bf16.mxu0 0
  %367 = vmatpush1.bf16.msra.mxu0 %v364
  %368 = vmatprep.subr.bf16.mxu0 0
  %369 = vmatpush1.bf16.msra.mxu0 0
  %370 = vmatprep.subr.bf16.mxu0 0
  %371 = vmatpush1.bf16.msra.mxu0 0
  %372 = vmatprep.subr.bf16.mxu0 0
  %373 = vmatpush1.bf16.msra.mxu0 0
  %374 = vmatprep.subr.bf16.mxu0 0
  %375 = vmatpush1.bf16.msra.mxu0 0
  %376 = vmatprep.subr.bf16.mxu0 0
  %377 = vmatpush1.bf16.msra.mxu0 0
  %378 = vmatprep.subr.bf16.mxu0 0
  %379 = vmatpush1.bf16.msra.mxu0 0
  %380 = vmatprep.subr.bf16.mxu0 0
  %381 = vmatpush1.bf16.msra.mxu0 0
  %382 = vmatprep.subr.bf16.mxu0 0
  %383 = vmatpush1.bf16.msra.mxu0 0
  %384 = vmatprep.subr.bf16.mxu0 0
  %385 = vmatpush1.bf16.msra.mxu0 0
  %386 = vmatprep.subr.bf16.mxu0 0
  %387 = vmatpush1.bf16.msra.mxu0 0
  %388 = vmatprep.subr.bf16.mxu0 0
  %389 = vmatpush1.bf16.msra.mxu0 0
  %390 = vmatprep.subr.bf16.mxu0 0
  %391 = vmatpush1.bf16.msra.mxu0 0
  %392 = vmatprep.subr.bf16.mxu0 0
  %393 = vmatpush1.bf16.msra.mxu0 0
  %394 = vmatprep.subr.bf16.mxu0 0
  %395 = vmatpush1.bf16.msra.mxu0 0
  %396 = vmatprep.subr.bf16.mxu0 0
  %397 = vmatpush1.bf16.msra.mxu0 0
  %398 = vmatprep.mubr.bf16.mxu0 0
  %399 = vmatmul.mubr.bf16.gmra.mrb[0].mxu0 %v361
  %v400 = vpop.f32.mrb[0].mxu0
  %v401 = vadd.f32 0.0, %v400
  %v402 = vpop.f32.mrb[0].mxu0
  %v403 = vpop.f32.mrb[0].mxu0
  %v404 = vpop.f32.mrb[0].mxu0
  %405 = vdwg.mxu0
  %407 = vrot.lane.b32.xlu0 %v401, 16
  %v408 = vpop.permute.xlu0 %407
  %v410 = vsel %vm183, %v289, %v408
  %s411 = scalar_lea.vmem %s1, 1
  %v412 = vld [vmem:[%s411] sm:$0x1]
  %vm413 = vcmp.gt.f32.partialorder %v412, 0.0
  %v414 = vsel %vm413, 1, 0
  %v415 = vlaneseq
  %v416 = vshrl.u32 %v415, 7
  %v417 = vsub.s32 0, %v416
  %v418 = vrot.slane %v414, %v417
  %vm419 = vcmp.eq.s32.totalorder %v418, 1
  %vm420 = vmand %vm168, %vm419
  %v421 = vsel %vm420, 0.0, -1e+09
  %v422 = vpack.c.bf16 %v161, %v161
  %424 = vrot.lane.b32.xlu0 %v422, 96
  %v425 = vpop.permute.xlu0 %424
  %v427 = vsel %vm183, %v422, 0
  %v430 = vsel %vm183, %v425, 0
  %432 = vmatprep.subr.bf16.mxu0 0
  %433 = vmatpush1.bf16.xpose.msra.mxu0 %v430
  %434 = vmatprep.subr.bf16.mxu0 0
  %435 = vmatpush1.bf16.xpose.msra.mxu0 0
  %436 = vmatprep.subr.bf16.mxu0 0
  %437 = vmatpush1.bf16.xpose.msra.mxu0 0
  %438 = vmatprep.subr.bf16.mxu0 0
  %439 = vmatpush1.bf16.xpose.msra.mxu0 0
  %440 = vmatprep.subr.bf16.mxu0 0
  %441 = vmatpush1.bf16.xpose.msra.mxu0 0
  %442 = vmatprep.subr.bf16.mxu0 0
  %443 = vmatpush1.bf16.xpose.msra.mxu0 0
  %444 = vmatprep.subr.bf16.mxu0 0
  %445 = vmatpush1.bf16.xpose.msra.mxu0 0
  %446 = vmatprep.subr.bf16.mxu0 0
  %447 = vmatpush1.bf16.xpose.msra.mxu0 0
  %448 = vmatprep.subr.bf16.mxu0 0
  %449 = vmatpush1.bf16.xpose.msra.mxu0 0
  %450 = vmatprep.subr.bf16.mxu0 0
  %451 = vmatpush1.bf16.xpose.msra.mxu0 0
  %452 = vmatprep.subr.bf16.mxu0 0
  %453 = vmatpush1.bf16.xpose.msra.mxu0 0
  %454 = vmatprep.subr.bf16.mxu0 0
  %455 = vmatpush1.bf16.xpose.msra.mxu0 0
  %456 = vmatprep.subr.bf16.mxu0 0
  %457 = vmatpush1.bf16.xpose.msra.mxu0 0
  %458 = vmatprep.subr.bf16.mxu0 0
  %459 = vmatpush1.bf16.xpose.msra.mxu0 0
  %460 = vmatprep.subr.bf16.mxu0 0
  %461 = vmatpush1.bf16.xpose.msra.mxu0 0
  %462 = vmatprep.subr.bf16.mxu0 0
  %463 = vmatpush1.bf16.xpose.msra.mxu0 0
  %464 = vmatprep.mubr.bf16.mxu0 0
  %465 = vmatmul.mubr.bf16.gmra.mrb[0].mxu0 %v427
  %v466 = vpop.f32.mrb[0].mxu0
  %v467 = vadd.f32 0.0, %v466
  %v468 = vpop.f32.mrb[0].mxu0
  %v469 = vpop.f32.mrb[0].mxu0
  %v470 = vpop.f32.mrb[0].mxu0
  %471 = vdwg.mxu0
  %v472 = vmul.f32 %v467, 0.25
  %v473 = vadd.f32 %v472, %v421
  %v474 = vsel %vm232, %v473, -inf
  %475 = vmax.xlane.f32.xlu0 %v474
  %v476 = vpop.xlane.xlu0 %475
  %v477 = vsub.f32 %v473, %v476
  %v478 = vmul.f32 %v477, 1.442695
  %v479 = vpow.pop %v478
  %v480 = vsel %vm232, %v479, 0.0
  %481 = vadd.xlane.f32.xlu0 %v480
  %v482 = vpop.xlane.xlu0 %481
  %v483 = vrcp.pop %v482
  %v484 = vmul.f32 %v479, %v483
  %v485 = vpack.c.bf16 %v484, %v484
  %486 = vrot.lane.b32.xlu0 %v422, 64
  %v487 = vpop.permute.xlu0 %486
  %v489 = vsel %vm232, %v485, 0
  %v492 = vsel %vm250, %v487, 0
  %494 = vmatprep.subr.bf16.mxu0 0
  %495 = vmatpush1.bf16.msra.mxu0 %v492
  %496 = vmatprep.subr.bf16.mxu0 0
  %497 = vmatpush1.bf16.msra.mxu0 0
  %498 = vmatprep.subr.bf16.mxu0 0
  %499 = vmatpush1.bf16.msra.mxu0 0
  %500 = vmatprep.subr.bf16.mxu0 0
  %501 = vmatpush1.bf16.msra.mxu0 0
  %502 = vmatprep.subr.bf16.mxu0 0
  %503 = vmatpush1.bf16.msra.mxu0 0
  %504 = vmatprep.subr.bf16.mxu0 0
  %505 = vmatpush1.bf16.msra.mxu0 0
  %506 = vmatprep.subr.bf16.mxu0 0
  %507 = vmatpush1.bf16.msra.mxu0 0
  %508 = vmatprep.subr.bf16.mxu0 0
  %509 = vmatpush1.bf16.msra.mxu0 0
  %510 = vmatprep.subr.bf16.mxu0 0
  %511 = vmatpush1.bf16.msra.mxu0 0
  %512 = vmatprep.subr.bf16.mxu0 0
  %513 = vmatpush1.bf16.msra.mxu0 0
  %514 = vmatprep.subr.bf16.mxu0 0
  %515 = vmatpush1.bf16.msra.mxu0 0
  %516 = vmatprep.subr.bf16.mxu0 0
  %517 = vmatpush1.bf16.msra.mxu0 0
  %518 = vmatprep.subr.bf16.mxu0 0
  %519 = vmatpush1.bf16.msra.mxu0 0
  %520 = vmatprep.subr.bf16.mxu0 0
  %521 = vmatpush1.bf16.msra.mxu0 0
  %522 = vmatprep.subr.bf16.mxu0 0
  %523 = vmatpush1.bf16.msra.mxu0 0
  %524 = vmatprep.subr.bf16.mxu0 0
  %525 = vmatpush1.bf16.msra.mxu0 0
  %526 = vmatprep.mubr.bf16.mxu0 0
  %527 = vmatmul.mubr.bf16.gmra.mrb[0].mxu0 %v489
  %v528 = vpop.f32.mrb[0].mxu0
  %v529 = vadd.f32 0.0, %v528
  %v530 = vpop.f32.mrb[0].mxu0
  %v531 = vpop.f32.mrb[0].mxu0
  %v532 = vpop.f32.mrb[0].mxu0
  %533 = vdwg.mxu0
  %534 = vrot.lane.b32.xlu0 %v422, 112
  %v535 = vpop.permute.xlu0 %534
  %536 = vrot.lane.b32.xlu0 %v422, 80
  %v537 = vpop.permute.xlu0 %536
  %v539 = vsel %vm183, %v535, 0
  %v542 = vsel %vm183, %v537, 0
  %544 = vmatprep.subr.bf16.mxu0 0
  %545 = vmatpush1.bf16.xpose.msra.mxu0 %v542
  %546 = vmatprep.subr.bf16.mxu0 0
  %547 = vmatpush1.bf16.xpose.msra.mxu0 0
  %548 = vmatprep.subr.bf16.mxu0 0
  %549 = vmatpush1.bf16.xpose.msra.mxu0 0
  %550 = vmatprep.subr.bf16.mxu0 0
  %551 = vmatpush1.bf16.xpose.msra.mxu0 0
  %552 = vmatprep.subr.bf16.mxu0 0
  %553 = vmatpush1.bf16.xpose.msra.mxu0 0
  %554 = vmatprep.subr.bf16.mxu0 0
  %555 = vmatpush1.bf16.xpose.msra.mxu0 0
  %556 = vmatprep.subr.bf16.mxu0 0
  %557 = vmatpush1.bf16.xpose.msra.mxu0 0
  %558 = vmatprep.subr.bf16.mxu0 0
  %559 = vmatpush1.bf16.xpose.msra.mxu0 0
  %560 = vmatprep.subr.bf16.mxu0 0
  %561 = vmatpush1.bf16.xpose.msra.mxu0 0
  %562 = vmatprep.subr.bf16.mxu0 0
  %563 = vmatpush1.bf16.xpose.msra.mxu0 0
  %564 = vmatprep.subr.bf16.mxu0 0
  %565 = vmatpush1.bf16.xpose.msra.mxu0 0
  %566 = vmatprep.subr.bf16.mxu0 0
  %567 = vmatpush1.bf16.xpose.msra.mxu0 0
  %568 = vmatprep.subr.bf16.mxu0 0
  %569 = vmatpush1.bf16.xpose.msra.mxu0 0
  %570 = vmatprep.subr.bf16.mxu0 0
  %571 = vmatpush1.bf16.xpose.msra.mxu0 0
  %572 = vmatprep.subr.bf16.mxu0 0
  %573 = vmatpush1.bf16.xpose.msra.mxu0 0
  %574 = vmatprep.subr.bf16.mxu0 0
  %575 = vmatpush1.bf16.xpose.msra.mxu0 0
  %576 = vmatprep.mubr.bf16.mxu0 0
  %577 = vmatmul.mubr.bf16.gmra.mrb[0].mxu0 %v539
  %v578 = vpop.f32.mrb[0].mxu0
  %v579 = vadd.f32 0.0, %v578
  %v580 = vpop.f32.mrb[0].mxu0
  %v581 = vpop.f32.mrb[0].mxu0
  %v582 = vpop.f32.mrb[0].mxu0
  %583 = vdwg.mxu0
  %v584 = vmul.f32 %v579, 0.25
  %v585 = vadd.f32 %v584, %v421
  %v586 = vsel %vm232, %v585, -inf
  %587 = vmax.xlane.f32.xlu0 %v586
  %v588 = vpop.xlane.xlu0 %587
  %v589 = vsub.f32 %v585, %v588
  %v590 = vmul.f32 %v589, 1.442695
  %v591 = vpow.pop %v590
  %v592 = vsel %vm232, %v591, 0.0
  %593 = vadd.xlane.f32.xlu0 %v592
  %v594 = vpop.xlane.xlu0 %593
  %v595 = vrcp.pop %v594
  %v596 = vmul.f32 %v591, %v595
  %v597 = vpack.c.bf16 %v596, %v596
  %598 = vrot.lane.b32.xlu0 %v422, 48
  %v599 = vpop.permute.xlu0 %598
  %v601 = vsel %vm232, %v597, 0
  %v604 = vsel %vm250, %v599, 0
  %606 = vmatprep.subr.bf16.mxu0 0
  %607 = vmatpush1.bf16.msra.mxu0 %v604
  %608 = vmatprep.subr.bf16.mxu0 0
  %609 = vmatpush1.bf16.msra.mxu0 0
  %610 = vmatprep.subr.bf16.mxu0 0
  %611 = vmatpush1.bf16.msra.mxu0 0
  %612 = vmatprep.subr.bf16.mxu0 0
  %613 = vmatpush1.bf16.msra.mxu0 0
  %614 = vmatprep.subr.bf16.mxu0 0
  %615 = vmatpush1.bf16.msra.mxu0 0
  %616 = vmatprep.subr.bf16.mxu0 0
  %617 = vmatpush1.bf16.msra.mxu0 0
  %618 = vmatprep.subr.bf16.mxu0 0
  %619 = vmatpush1.bf16.msra.mxu0 0
  %620 = vmatprep.subr.bf16.mxu0 0
  %621 = vmatpush1.bf16.msra.mxu0 0
  %622 = vmatprep.subr.bf16.mxu0 0
  %623 = vmatpush1.bf16.msra.mxu0 0
  %624 = vmatprep.subr.bf16.mxu0 0
  %625 = vmatpush1.bf16.msra.mxu0 0
  %626 = vmatprep.subr.bf16.mxu0 0
  %627 = vmatpush1.bf16.msra.mxu0 0
  %628 = vmatprep.subr.bf16.mxu0 0
  %629 = vmatpush1.bf16.msra.mxu0 0
  %630 = vmatprep.subr.bf16.mxu0 0
  %631 = vmatpush1.bf16.msra.mxu0 0
  %632 = vmatprep.subr.bf16.mxu0 0
  %633 = vmatpush1.bf16.msra.mxu0 0
  %634 = vmatprep.subr.bf16.mxu0 0
  %635 = vmatpush1.bf16.msra.mxu0 0
  %636 = vmatprep.subr.bf16.mxu0 0
  %637 = vmatpush1.bf16.msra.mxu0 0
  %638 = vmatprep.mubr.bf16.mxu0 0
  %639 = vmatmul.mubr.bf16.gmra.mrb[0].mxu0 %v601
  %v640 = vpop.f32.mrb[0].mxu0
  %v641 = vadd.f32 0.0, %v640
  %v642 = vpop.f32.mrb[0].mxu0
  %v643 = vpop.f32.mrb[0].mxu0
  %v644 = vpop.f32.mrb[0].mxu0
  %645 = vdwg.mxu0
  %647 = vrot.lane.b32.xlu0 %v641, 16
  %v648 = vpop.permute.xlu0 %647
  %v650 = vsel %vm183, %v529, %v648
  %v651 = vpack.c.bf16 %v650, %v410
  %v652 = vld [vmem:[%s6] sm:$0xf]
  %v653 = vld [vmem:[%s6 + $0x4] sm:$0xf]
  %v654 = vld [vmem:[%s6 + $0x8] sm:$0xf]
  %v655 = vld [vmem:[%s6 + $0xc] sm:$0xf]
  %v656 = vld [vmem:[%s7] sm:$0x1]
  %v658 = vlaneseq
  %v659 = vshrl.u32 %v658, 7
  %v660 = vsub.s32 0, %v659
  %v661 = vrot.slane %v656, %v660
  %v667 = vunpack.c.l.b16 %v652
  %v668 = vunpack.c.l.b16 %v653
  %v669 = vunpack.c.l.b16 %v654
  %v670 = vunpack.c.l.b16 %v655
  %v671 = vpack.c.b16 %v668, %v667
  %v672 = vpack.c.b16 %v670, %v669
  %v676 = vsel %vm52, %v651, 0
  %678 = vmatprep.subr.bf16.mxu0 0
  %679 = vmatpush1.bf16.msra.mxu0 %v671
  %680 = vmatprep.subr.bf16.mxu0 0
  %681 = vmatpush1.bf16.msra.mxu0 %v672
  %682 = vmatprep.subr.bf16.mxu0 0
  %683 = vmatpush1.bf16.msra.mxu0 0
  %684 = vmatprep.subr.bf16.mxu0 0
  %685 = vmatpush1.bf16.msra.mxu0 0
  %686 = vmatprep.subr.bf16.mxu0 0
  %687 = vmatpush1.bf16.msra.mxu0 0
  %688 = vmatprep.subr.bf16.mxu0 0
  %689 = vmatpush1.bf16.msra.mxu0 0
  %690 = vmatprep.subr.bf16.mxu0 0
  %691 = vmatpush1.bf16.msra.mxu0 0
  %692 = vmatprep.subr.bf16.mxu0 0
  %693 = vmatpush1.bf16.msra.mxu0 0
  %694 = vmatprep.subr.bf16.mxu0 0
  %695 = vmatpush1.bf16.msra.mxu0 0
  %696 = vmatprep.subr.bf16.mxu0 0
  %697 = vmatpush1.bf16.msra.mxu0 0
  %698 = vmatprep.subr.bf16.mxu0 0
  %699 = vmatpush1.bf16.msra.mxu0 0
  %700 = vmatprep.subr.bf16.mxu0 0
  %701 = vmatpush1.bf16.msra.mxu0 0
  %702 = vmatprep.subr.bf16.mxu0 0
  %703 = vmatpush1.bf16.msra.mxu0 0
  %704 = vmatprep.subr.bf16.mxu0 0
  %705 = vmatpush1.bf16.msra.mxu0 0
  %706 = vmatprep.subr.bf16.mxu0 0
  %707 = vmatpush1.bf16.msra.mxu0 0
  %708 = vmatprep.subr.bf16.mxu0 0
  %709 = vmatpush1.bf16.msra.mxu0 0
  %710 = vmatprep.mubr.bf16.mxu0 0
  %711 = vmatmul.mubr.bf16.gmra.mrb[0].mxu0 %v676
  %v712 = vpop.f32.mrb[0].mxu0
  %v713 = vadd.f32 %v661, %v712
  %v714 = vpop.f32.mrb[0].mxu0
  %v715 = vpop.f32.mrb[0].mxu0
  %v716 = vadd.f32 %v661, %v715
  %v717 = vpop.f32.mrb[0].mxu0
  %718 = vdwg.mxu0
  %v719 = vadd.f32 %v48, %v713
  %v720 = vadd.f32 %v49, %v716
  %v721 = vld [vmem:[%s8] sm:$0x1]
  %v722 = vld [vmem:[%s9] sm:$0x1]
  %v723 = vsel %vm52, %v719, 0.0
  %724 = vadd.xlane.f32.xlu0 %v723
  %v725 = vpop.xlane.xlu0 %724
  %v726 = vsel %vm52, %v720, 0.0
  %727 = vadd.xlane.f32.xlu0 %v726
  %v728 = vpop.xlane.xlu0 %727
  %v729 = vmul.f32 %v725, %v59
  %v730 = vmul.f32 %v728, %v59
  %v731 = vsub.f32 %v719, %v729
  %v732 = vsub.f32 %v720, %v730
  %v733 = vmul.f32 %v731, %v731
  %v734 = vmul.f32 %v732, %v732
  %v735 = vsel %vm52, %v733, 0.0
  %736 = vadd.xlane.f32.xlu0 %v735
  %v737 = vpop.xlane.xlu0 %736
  %v738 = vsel %vm52, %v734, 0.0
  %739 = vadd.xlane.f32.xlu0 %v738
  %v740 = vpop.xlane.xlu0 %739
  %v741 = vmul.f32 %v737, %v59
  %v742 = vmul.f32 %v740, %v59
  %v743 = vadd.f32 %v741, 1e-05
  %v744 = vadd.f32 %v742, 1e-05
  %v745 = vrsqrt.pop %v743
  %v746 = vrsqrt.pop %v744
  %v747 = vmul.f32 %v731, %v745
  %v748 = vmul.f32 %v732, %v746
  %v750 = vlaneseq
  %v751 = vshrl.u32 %v750, 7
  %v752 = vsub.s32 0, %v751
  %v753 = vrot.slane %v721, %v752
  %v755 = vmul.f32 %v747, %v753
  %v756 = vmul.f32 %v748, %v753
  %v758 = vlaneseq
  %v759 = vshrl.u32 %v758, 7
  %v760 = vsub.s32 0, %v759
  %v761 = vrot.slane %v722, %v760
  %v763 = vadd.f32 %v755, %v761
  %v764 = vadd.f32 %v756, %v761
  %v765 = vpack.c.bf16 %v764, %v763
  %v766 = vld [vmem:[%s10] sm:$0xf]
  %v767 = vld [vmem:[%s10 + $0x4] sm:$0xf]
  %v768 = vld [vmem:[%s10 + $0x8] sm:$0xf]
  %v769 = vld [vmem:[%s10 + $0xc] sm:$0xf]
  %v770 = vld [vmem:[%s11] sm:$0x1]
  %v772 = vlaneseq
  %v773 = vshrl.u32 %v772, 7
  %v774 = vsub.s32 0, %v773
  %v775 = vrot.slane %v770, %v774
  %v781 = vunpack.c.l.b16 %v766
  %v782 = vunpack.c.l.b16 %v767
  %v783 = vunpack.c.l.b16 %v768
  %v784 = vunpack.c.l.b16 %v769
  %v785 = vpack.c.b16 %v782, %v781
  %v786 = vpack.c.b16 %v784, %v783
  %v790 = vsel %vm52, %v765, 0
  %792 = vmatprep.subr.bf16.mxu0 0
  %793 = vmatpush1.bf16.msra.mxu0 %v785
  %794 = vmatprep.subr.bf16.mxu0 0
  %795 = vmatpush1.bf16.msra.mxu0 %v786
  %796 = vmatprep.subr.bf16.mxu0 0
  %797 = vmatpush1.bf16.msra.mxu0 0
  %798 = vmatprep.subr.bf16.mxu0 0
  %799 = vmatpush1.bf16.msra.mxu0 0
  %800 = vmatprep.subr.bf16.mxu0 0
  %801 = vmatpush1.bf16.msra.mxu0 0
  %802 = vmatprep.subr.bf16.mxu0 0
  %803 = vmatpush1.bf16.msra.mxu0 0
  %804 = vmatprep.subr.bf16.mxu0 0
  %805 = vmatpush1.bf16.msra.mxu0 0
  %806 = vmatprep.subr.bf16.mxu0 0
  %807 = vmatpush1.bf16.msra.mxu0 0
  %808 = vmatprep.subr.bf16.mxu0 0
  %809 = vmatpush1.bf16.msra.mxu0 0
  %810 = vmatprep.subr.bf16.mxu0 0
  %811 = vmatpush1.bf16.msra.mxu0 0
  %812 = vmatprep.subr.bf16.mxu0 0
  %813 = vmatpush1.bf16.msra.mxu0 0
  %814 = vmatprep.subr.bf16.mxu0 0
  %815 = vmatpush1.bf16.msra.mxu0 0
  %816 = vmatprep.subr.bf16.mxu0 0
  %817 = vmatpush1.bf16.msra.mxu0 0
  %818 = vmatprep.subr.bf16.mxu0 0
  %819 = vmatpush1.bf16.msra.mxu0 0
  %820 = vmatprep.subr.bf16.mxu0 0
  %821 = vmatpush1.bf16.msra.mxu0 0
  %822 = vmatprep.subr.bf16.mxu0 0
  %823 = vmatpush1.bf16.msra.mxu0 0
  %824 = vmatprep.mubr.bf16.mxu0 0
  %825 = vmatmul.mubr.bf16.gmra.mrb[0].mxu0 %v790
  %v826 = vpop.f32.mrb[0].mxu0
  %v827 = vadd.f32 %v775, %v826
  %v828 = vpop.f32.mrb[0].mxu0
  %v829 = vpop.f32.mrb[0].mxu0
  %v830 = vadd.f32 %v775, %v829
  %v831 = vpop.f32.mrb[0].mxu0
  %832 = vdwg.mxu0
  %v833 = vmul.f32 %v827, 0.5
  %v834 = vmul.f32 %v830, 0.5
  %v835 = vmul.f32 %v827, 0.044715
  %v836 = vmul.f32 %v830, 0.044715
  %v837 = vmul.f32 %v835, %v827
  %v838 = vmul.f32 %v836, %v830
  %v839 = vmul.f32 %v837, %v827
  %v840 = vmul.f32 %v838, %v830
  %v841 = vadd.f32 %v827, %v839
  %v842 = vadd.f32 %v830, %v840
  %v843 = vmul.f32 %v841, 0.7978846
  %v844 = vmul.f32 %v842, 0.7978846
  %v845 = vtanh.pop %v843
  %v846 = vtanh.pop %v844
  %v847 = vadd.f32 %v845, 1.0
  %v848 = vadd.f32 %v846, 1.0
  %v849 = vmul.f32 %v833, %v847
  %v850 = vmul.f32 %v834, %v848
  %v851 = vpack.c.bf16 %v850, %v849
  %v852 = vld [vmem:[%s12] sm:$0xf]
  %v853 = vld [vmem:[%s12 + $0x4] sm:$0xf]
  %v854 = vld [vmem:[%s12 + $0x8] sm:$0xf]
  %v855 = vld [vmem:[%s12 + $0xc] sm:$0xf]
  %v856 = vld [vmem:[%s12 + $0x10] sm:$0xf]
  %v857 = vld [vmem:[%s12 + $0x14] sm:$0xf]
  %v858 = vld [vmem:[%s12 + $0x18] sm:$0xf]
  %v859 = vld [vmem:[%s12 + $0x1c] sm:$0xf]
  %v860 = vld [vmem:[%s12 + $0x20] sm:$0xf]
  %v861 = vld [vmem:[%s12 + $0x24] sm:$0xf]
  %v862 = vld [vmem:[%s12 + $0x28] sm:$0xf]
  %v863 = vld [vmem:[%s12 + $0x2c] sm:$0xf]
  %v864 = vld [vmem:[%s12 + $0x30] sm:$0xf]
  %v865 = vld [vmem:[%s12 + $0x34] sm:$0xf]
  %v866 = vld [vmem:[%s12 + $0x38] sm:$0xf]
  %v867 = vld [vmem:[%s12 + $0x3c] sm:$0xf]
  %v884 = vunpack.c.l.b16 %v852
  %v885 = vunpack.c.l.b16 %v853
  %v886 = vunpack.c.l.b16 %v854
  %v887 = vunpack.c.l.b16 %v855
  %v888 = vunpack.c.l.b16 %v856
  %v889 = vunpack.c.l.b16 %v857
  %v890 = vunpack.c.l.b16 %v858
  %v891 = vunpack.c.l.b16 %v859
  %v892 = vunpack.c.l.b16 %v860
  %v893 = vunpack.c.l.b16 %v861
  %v894 = vunpack.c.l.b16 %v862
  %v895 = vunpack.c.l.b16 %v863
  %v896 = vunpack.c.l.b16 %v864
  %v897 = vunpack.c.l.b16 %v865
  %v898 = vunpack.c.l.b16 %v866
  %v899 = vunpack.c.l.b16 %v867
  %v900 = vpack.c.b16 %v885, %v884
  %v901 = vpack.c.b16 %v887, %v886
  %v902 = vpack.c.b16 %v889, %v888
  %v903 = vpack.c.b16 %v891, %v890
  %v904 = vpack.c.b16 %v893, %v892
  %v905 = vpack.c.b16 %v895, %v894
  %v906 = vpack.c.b16 %v897, %v896
  %v907 = vpack.c.b16 %v899, %v898
  %916 = vmatprep.subr.bf16.mxu0 0
  %917 = vmatpush1.bf16.msra.mxu0 %v900
  %918 = vmatprep.subr.bf16.mxu0 0
  %919 = vmatpush1.bf16.msra.mxu0 %v901
  %920 = vmatprep.subr.bf16.mxu0 0
  %921 = vmatpush1.bf16.msra.mxu0 %v902
  %922 = vmatprep.subr.bf16.mxu0 0
  %923 = vmatpush1.bf16.msra.mxu0 %v903
  %924 = vmatprep.subr.bf16.mxu0 0
  %925 = vmatpush1.bf16.msra.mxu0 %v904
  %926 = vmatprep.subr.bf16.mxu0 0
  %927 = vmatpush1.bf16.msra.mxu0 %v905
  %928 = vmatprep.subr.bf16.mxu0 0
  %929 = vmatpush1.bf16.msra.mxu0 %v906
  %930 = vmatprep.subr.bf16.mxu0 0
  %931 = vmatpush1.bf16.msra.mxu0 %v907
  %932 = vmatprep.subr.bf16.mxu0 0
  %933 = vmatpush1.bf16.msra.mxu0 0
  %934 = vmatprep.subr.bf16.mxu0 0
  %935 = vmatpush1.bf16.msra.mxu0 0
  %936 = vmatprep.subr.bf16.mxu0 0
  %937 = vmatpush1.bf16.msra.mxu0 0
  %938 = vmatprep.subr.bf16.mxu0 0
  %939 = vmatpush1.bf16.msra.mxu0 0
  %940 = vmatprep.subr.bf16.mxu0 0
  %941 = vmatpush1.bf16.msra.mxu0 0
  %942 = vmatprep.subr.bf16.mxu0 0
  %943 = vmatpush1.bf16.msra.mxu0 0
  %944 = vmatprep.subr.bf16.mxu0 0
  %945 = vmatpush1.bf16.msra.mxu0 0
  %946 = vmatprep.subr.bf16.mxu0 0
  %947 = vmatpush1.bf16.msra.mxu0 0
  %948 = vmatprep.mubr.bf16.mxu0 0
  %949 = vmatmul.mubr.bf16.gmra.mrb[0].mxu0 %v851
  %v950 = vpop.f32.mrb[0].mxu0
  %v951 = vadd.f32 0.0, %v950
  %v952 = vpop.f32.mrb[0].mxu0
  %v953 = vpop.f32.mrb[0].mxu0
  %v954 = vadd.f32 0.0, %v953
  %v955 = vpop.f32.mrb[0].mxu0
  %956 = vdwg.mxu0
  %v957 = vadd.f32 %v719, %v951
  %v958 = vadd.f32 %v720, %v954
  %v959 = vld [vmem:[%s13] sm:$0x1]
  %v961 = vlaneseq
  %v962 = vshrl.u32 %v961, 7
  %v963 = vsub.s32 0, %v962
  %v964 = vrot.slane %v959, %v963
  %v966 = vadd.f32 %v957, %v964
  %v967 = vadd.f32 %v958, %v964
  %968 = vst.msk [vmem:[%s14] sm:$0xff] %vm52, %v966
  %969 = vst.msk [vmem:[%s14 + $0x8] sm:$0xff] %vm52, %v967
  // Predicated region
  $region58: #{gpt_forward.3} parent=0 // pred_check
    _
  $region59: #{gpt_forward.3} parent=0 // pred_check_branch
    %971 = sbr.rel (0) target = $region61
  $region60: #{gpt_forward.3} parent=0 // pred_region
    _
  $region61: #{gpt_forward.3} parent=0 // pred_fallthru
    _
  // Predicated region
  $region62: #{gpt_forward.3} parent=0 // pred_check
    _
  $region63: #{gpt_forward.3} parent=0 // pred_check_branch
    %973 = sbr.rel (0) target = $region65
  $region64: #{gpt_forward.3} parent=0 // pred_region
    _
  $region65: #{gpt_forward.3} parent=0 // pred_fallthru
    _

</llo_original>
